<compile_context>
chip_gen: v6e
topology: v6e:2x2x1
jax: 0.10.0
libtpu: 0.0.40
codegen_flags: <defaults>
</compile_context>

<pallas_src>
import math
from functools import partial

import jax
import jax.numpy as jnp
from jax import lax
from jax.experimental import pallas as pl
from jax.experimental.pallas import tpu as pltpu


def _layer_norm(x, gamma, beta, eps):
    mu = jnp.mean(x, axis=-1, keepdims=True)
    var = jnp.mean((x - mu) ** 2, axis=-1, keepdims=True)
    return (x - mu) * jax.lax.rsqrt(var + eps) * gamma + beta


# NT contraction: (S, Dh) x (M, Dh) -> (S, M), no explicit transpose materialized.
_NT_DIMS = (((1,), (1,)), ((), ()))


def _encoder_kernel(num_heads, head_dim, eps, compute_dtype,
                    src_ref, mem_ref,
                    wq_ref, bq_ref, wkv_ref, bkv_ref,
                    wo_ref, bo_ref,
                    w1_ref, b1_ref, w2_ref, b2_ref,
                    g1_ref, beta1_ref, g2_ref, beta2_ref,
                    out_ref):
    f32 = jnp.float32
    D = num_heads * head_dim

    x = src_ref[...]                               # (S_tile, D)  input dtype
    m = mem_ref[...]                               # (M, D)
    xc = x.astype(compute_dtype)
    mc = m.astype(compute_dtype)

    # ---- projections (weights are pre-transposed to (in, out), f32 accumulate) ----
    q = jnp.dot(xc, wq_ref[...], preferred_element_type=f32) + bq_ref[...]
    q = q * (1.0 / math.sqrt(head_dim))            # fold softmax scale into q once
    kv = jnp.dot(mc, wkv_ref[...], preferred_element_type=f32) + bkv_ref[...]
    k = kv[:, :D]                                  # (M, D)
    v = kv[:, D:]                                  # (M, D)

    # ---- multi-head attention: accumulate head outputs in registers, one dense write ----
    head_outs = []
    for h in range(num_heads):                     # static loop over heads
        sl = slice(h * head_dim, (h + 1) * head_dim)
        qh = q[:, sl].astype(compute_dtype)        # (S, Dh)
        kh = k[:, sl].astype(compute_dtype)        # (M, Dh)
        vh = v[:, sl].astype(compute_dtype)        # (M, Dh)
        s = lax.dot_general(qh, kh, _NT_DIMS,
                            preferred_element_type=f32)        # (S, M)
        s = s - jnp.max(s, axis=-1, keepdims=True)
        p = jnp.exp(s)
        inv = pl.reciprocal(jnp.sum(p, axis=-1, keepdims=True), approx=True)
        p = p * inv
        head_outs.append(jnp.dot(p.astype(compute_dtype), vh,
                                 preferred_element_type=f32))  # (S, Dh)
    attn = jnp.concatenate(head_outs, axis=-1)     # (S, D) dense, single materialization

    attn = jnp.dot(attn.astype(compute_dtype), wo_ref[...],
                   preferred_element_type=f32) + bo_ref[...]

    # ---- residual + norm1 (post-norm), f32 math ----
    h1 = _layer_norm(x.astype(f32) + attn, g1_ref[...], beta1_ref[...], eps)

    # ---- feed-forward: linear1 -> relu -> linear2 ----
    ff = jnp.dot(h1.astype(compute_dtype), w1_ref[...],
                 preferred_element_type=f32) + b1_ref[...]
    ff = jnp.maximum(ff, 0.0)
    ff = jnp.dot(ff.astype(compute_dtype), w2_ref[...],
                 preferred_element_type=f32) + b2_ref[...]

    # ---- residual + norm2 ----
    out = _layer_norm(h1 + ff, g2_ref[...], beta2_ref[...], eps)
    out_ref[...] = out.astype(out_ref.dtype)


def transformer_encoder_layer(src, memory, params, *, num_heads, eps=1e-5,
                              compute_dtype=None, s_block=None):
    """params follow the PyTorch nn.Linear convention W:(out, in), b:(1, out)."""
    B, S, D = src.shape
    _, M, _ = memory.shape
    assert D % num_heads == 0, "embed_dim must be divisible by num_heads"
    head_dim = D // num_heads
    if compute_dtype is None:
        compute_dtype = src.dtype

    (wq, bq, wk, bk, wv, bv, wo, bo, w1, b1, w2, b2, g1, be1, g2, be2) = params

    # Host-side weight prep: pre-transpose to (in, out) so the kernel never
    # transposes on the XLU; fuse K & V projections into a single (D, 2D) matmul.
    f32 = lambda a: a.astype(jnp.float32)
    cdt = lambda a: a.astype(compute_dtype)
    weights = (
        cdt(wq.T), f32(bq),
        cdt(jnp.concatenate([wk.T, wv.T], axis=1)),     # (D, 2D)
        f32(jnp.concatenate([bk, bv], axis=1)),          # (1, 2D)
        cdt(wo.T), f32(bo),
        cdt(w1.T), f32(b1),
        cdt(w2.T), f32(b2),
        f32(g1), f32(be1), f32(g2), f32(be2),
    )

    # S-tiling keeps the (S_tile, F) FFN intermediate bounded in VMEM and gives
    # extra parallel grid steps (both v7x TensorCores) for small batch sizes.
    if s_block is None:
        s_block = min(S, 256)
    grid = (B, pl.cdiv(S, s_block))

    def wspec(arr):
        return pl.BlockSpec(arr.shape, lambda b, s: (0, 0))   # resident across grid

    in_specs = [
        pl.BlockSpec((None, s_block, D), lambda b, s: (b, s, 0)),   # src tile (S_t, D)
        pl.BlockSpec((None, M, D), lambda b, s: (b, 0, 0)),         # memory   (M, D)
    ] + [wspec(w) for w in weights]
    out_spec = pl.BlockSpec((None, s_block, D), lambda b, s: (b, s, 0))

    kernel = partial(_encoder_kernel, num_heads, head_dim, eps, compute_dtype)
    return pl.pallas_call(
        kernel,
        out_shape=jax.ShapeDtypeStruct((B, S, D), src.dtype),
        grid_spec=pltpu.PrefetchScalarGridSpec(
            num_scalar_prefetch=0,
            grid=grid,
            in_specs=in_specs,
            out_specs=out_spec,
        ),
        compiler_params=pltpu.CompilerParams(
            dimension_semantics=("parallel", "parallel")),
    )(src, memory, *weights)
    # TODO(synk): for very large D/F on v7x (64 MiB VMEM), additionally tile the FFN
    # over dim_feedforward (extra "arbitrary" grid axis) and raise vmem_limit_bytes.


def init_params(key, d_model, dim_feedforward):
    """Deterministic init mirroring nn.Linear / nn.LayerNorm defaults."""
    keys = jax.random.split(key, 6)

    def lin(k, out_f, in_f):
        bound = 1.0 / math.sqrt(in_f)
        kw, kb = jax.random.split(k)
        w = jax.random.uniform(kw, (out_f, in_f), jnp.float32, -bound, bound)
        b = jax.random.uniform(kb, (1, out_f), jnp.float32, -bound, bound)
        return w, b

    wq, bq = lin(keys[0], d_model, d_model)
    wk, bk = lin(keys[1], d_model, d_model)
    wv, bv = lin(keys[2], d_model, d_model)
    wo, bo = lin(keys[3], d_model, d_model)
    w1, b1 = lin(keys[4], dim_feedforward, d_model)
    w2, b2 = lin(keys[5], d_model, dim_feedforward)
    g1 = jnp.ones((1, d_model), jnp.float32)
    be1 = jnp.zeros((1, d_model), jnp.float32)
    g2 = jnp.ones((1, d_model), jnp.float32)
    be2 = jnp.zeros((1, d_model), jnp.float32)
    return (wq, bq, wk, bk, wv, bv, wo, bo, w1, b1, w2, b2, g1, be1, g2, be2)


def reference(src, memory, params, num_heads, eps=1e-5):
    (wq, bq, wk, bk, wv, bv, wo, bo, w1, b1, w2, b2, g1, be1, g2, be2) = params
    B, S, D = src.shape
    Dh = D // num_heads

    def ln(x, g, b):
        mu = x.mean(-1, keepdims=True)
        var = ((x - mu) ** 2).mean(-1, keepdims=True)
        return (x - mu) / jnp.sqrt(var + eps) * g + b

    q = (src @ wq.T + bq).reshape(B, S, num_heads, Dh).transpose(0, 2, 1, 3)
    k = (memory @ wk.T + bk).reshape(B, -1, num_heads, Dh).transpose(0, 2, 1, 3)
    v = (memory @ wv.T + bv).reshape(B, -1, num_heads, Dh).transpose(0, 2, 1, 3)
    s = jnp.einsum('bhqd,bhkd->bhqk', q, k) / math.sqrt(Dh)
    p = jax.nn.softmax(s, axis=-1)
    a = jnp.einsum('bhqk,bhkd->bhqd', p, v).transpose(0, 2, 1, 3).reshape(B, S, D)
    a = a @ wo.T + bo
    h1 = ln(src + a, g1, be1)
    ff = jnp.maximum(h1 @ w1.T + b1, 0.0) @ w2.T + b2
    return ln(h1 + ff, g2, be2)


if __name__ == "__main__":
    B, S, M, D, H, F = 2, 8, 8, 32, 4, 64   # small, consistent with the module
    key = jax.random.PRNGKey(0)
    k_src, k_mem, k_par = jax.random.split(key, 3)

    src = jax.random.normal(k_src, (B, S, D), jnp.float32)
    memory = jax.random.normal(k_mem, (B, M, D), jnp.float32)
    params = init_params(k_par, D, F)
    ref = reference(src, memory, params, H)

    # f32-MXU path. Tolerance is loosened slightly because the softmax uses the
    # approximate EUP reciprocal (pl.reciprocal(approx=True)).
    out = transformer_encoder_layer(src, memory, params, num_heads=H)
    out = jax.block_until_ready(out)
    assert out.shape == (B, S, D)
    err = jnp.max(jnp.abs(out - ref))
    assert jnp.allclose(out, ref, atol=2e-2, rtol=2e-2), f"f32 max abs err {err}"

    # bf16-MXU path (bf16 weights/activations, f32 accumulation, f32 LN/softmax).
    out_bf = transformer_encoder_layer(src, memory, params, num_heads=H,
                                       compute_dtype=jnp.bfloat16)
    out_bf = jax.block_until_ready(out_bf)
    err_bf = jnp.max(jnp.abs(out_bf - ref))
    assert jnp.allclose(out_bf, ref, atol=1e-1, rtol=1e-1), f"bf16 max abs err {err_bf}"

    print("KERNEL_OK")
</pallas_src>

<mosaic_0001>
module attributes {stable_mosaic.version = 11 : i64} {
  func.func @_encoder_kernel(%arg0: i32, %arg1: i32, %arg2: memref<1x8x32xf32, #tpu.memory_space<vmem>>, %arg3: memref<1x8x32xf32, #tpu.memory_space<vmem>>, %arg4: memref<32x32xf32, #tpu.memory_space<vmem>>, %arg5: memref<1x32xf32, #tpu.memory_space<vmem>>, %arg6: memref<32x64xf32, #tpu.memory_space<vmem>>, %arg7: memref<1x64xf32, #tpu.memory_space<vmem>>, %arg8: memref<32x32xf32, #tpu.memory_space<vmem>>, %arg9: memref<1x32xf32, #tpu.memory_space<vmem>>, %arg10: memref<32x64xf32, #tpu.memory_space<vmem>>, %arg11: memref<1x64xf32, #tpu.memory_space<vmem>>, %arg12: memref<64x32xf32, #tpu.memory_space<vmem>>, %arg13: memref<1x32xf32, #tpu.memory_space<vmem>>, %arg14: memref<1x32xf32, #tpu.memory_space<vmem>>, %arg15: memref<1x32xf32, #tpu.memory_space<vmem>>, %arg16: memref<1x32xf32, #tpu.memory_space<vmem>>, %arg17: memref<1x32xf32, #tpu.memory_space<vmem>>, %arg18: memref<1x8x32xf32, #tpu.memory_space<vmem>>) attributes {dimension_semantics = [#tpu.dimension_semantics<parallel>, #tpu.dimension_semantics<parallel>], iteration_bounds = array<i64: 2, 1>, scalar_prefetch = 0 : i64, scratch_operands = 0 : i64, tpu.core_type = #tpu.core_type<tc>, window_params = [{transform_indices = @transform_0, window_bounds = array<i64: 1, 8, 32>}, {transform_indices = @transform_1, window_bounds = array<i64: 1, 8, 32>}, {pipeline_mode = #tpu.pipeline_mode<synchronous>, transform_indices = @transform_2, window_bounds = array<i64: 32, 32>}, {pipeline_mode = #tpu.pipeline_mode<synchronous>, transform_indices = @transform_3, window_bounds = array<i64: 1, 32>}, {pipeline_mode = #tpu.pipeline_mode<synchronous>, transform_indices = @transform_4, window_bounds = array<i64: 32, 64>}, {pipeline_mode = #tpu.pipeline_mode<synchronous>, transform_indices = @transform_5, window_bounds = array<i64: 1, 64>}, {pipeline_mode = #tpu.pipeline_mode<synchronous>, transform_indices = @transform_6, window_bounds = array<i64: 32, 32>}, {pipeline_mode = #tpu.pipeline_mode<synchronous>, transform_indices = @transform_7, window_bounds = array<i64: 1, 32>}, {pipeline_mode = #tpu.pipeline_mode<synchronous>, transform_indices = @transform_8, window_bounds = array<i64: 32, 64>}, {pipeline_mode = #tpu.pipeline_mode<synchronous>, transform_indices = @transform_9, window_bounds = array<i64: 1, 64>}, {pipeline_mode = #tpu.pipeline_mode<synchronous>, transform_indices = @transform_10, window_bounds = array<i64: 64, 32>}, {pipeline_mode = #tpu.pipeline_mode<synchronous>, transform_indices = @transform_11, window_bounds = array<i64: 1, 32>}, {pipeline_mode = #tpu.pipeline_mode<synchronous>, transform_indices = @transform_12, window_bounds = array<i64: 1, 32>}, {pipeline_mode = #tpu.pipeline_mode<synchronous>, transform_indices = @transform_13, window_bounds = array<i64: 1, 32>}, {pipeline_mode = #tpu.pipeline_mode<synchronous>, transform_indices = @transform_14, window_bounds = array<i64: 1, 32>}, {pipeline_mode = #tpu.pipeline_mode<synchronous>, transform_indices = @transform_15, window_bounds = array<i64: 1, 32>}, {transform_indices = @transform_16, window_bounds = array<i64: 1, 8, 32>}]} {
    %c0 = arith.constant 0 : index
    %c0_0 = arith.constant 0 : index
    %c0_1 = arith.constant 0 : index
    %0 = vector.load %arg2[%c0, %c0_0, %c0_1] : memref<1x8x32xf32, #tpu.memory_space<vmem>>, vector<1x8x32xf32>
    %1 = vector.shape_cast %0 : vector<1x8x32xf32> to vector<8x32xf32>
    %c0_2 = arith.constant 0 : index
    %c0_3 = arith.constant 0 : index
    %c0_4 = arith.constant 0 : index
    %2 = vector.load %arg3[%c0_2, %c0_3, %c0_4] : memref<1x8x32xf32, #tpu.memory_space<vmem>>, vector<1x8x32xf32>
    %3 = vector.shape_cast %2 : vector<1x8x32xf32> to vector<8x32xf32>
    %c0_5 = arith.constant 0 : index
    %c0_6 = arith.constant 0 : index
    %4 = vector.load %arg4[%c0_5, %c0_6] : memref<32x32xf32, #tpu.memory_space<vmem>>, vector<32x32xf32>
    %cst = arith.constant dense<0.000000e+00> : vector<8x32xf32>
    %5 = tpu.matmul %1, %4, %cst {dimension_numbers = #tpu.dot_dimension_numbers<[1], [0], [0], [1], [0, 0, 1, 1], [], []>} : vector<8x32xf32>, vector<32x32xf32>, vector<8x32xf32> -> vector<8x32xf32>
    %c0_7 = arith.constant 0 : index
    %c0_8 = arith.constant 0 : index
    %6 = vector.load %arg5[%c0_7, %c0_8] : memref<1x32xf32, #tpu.memory_space<vmem>>, vector<1x32xf32>
    %7 = vector.broadcast %6 : vector<1x32xf32> to vector<8x32xf32>
    %8 = arith.addf %5, %7 : vector<8x32xf32>
    %cst_9 = arith.constant 0.353553385 : f32
    %9 = vector.broadcast %cst_9 : f32 to vector<8x32xf32>
    %10 = arith.mulf %8, %9 : vector<8x32xf32>
    %c0_10 = arith.constant 0 : index
    %c0_11 = arith.constant 0 : index
    %11 = vector.load %arg6[%c0_10, %c0_11] : memref<32x64xf32, #tpu.memory_space<vmem>>, vector<32x64xf32>
    %cst_12 = arith.constant dense<0.000000e+00> : vector<8x64xf32>
    %12 = tpu.matmul %3, %11, %cst_12 {dimension_numbers = #tpu.dot_dimension_numbers<[1], [0], [0], [1], [0, 0, 1, 1], [], []>} : vector<8x32xf32>, vector<32x64xf32>, vector<8x64xf32> -> vector<8x64xf32>
    %c0_13 = arith.constant 0 : index
    %c0_14 = arith.constant 0 : index
    %13 = vector.load %arg7[%c0_13, %c0_14] : memref<1x64xf32, #tpu.memory_space<vmem>>, vector<1x64xf32>
    %14 = vector.broadcast %13 : vector<1x64xf32> to vector<8x64xf32>
    %15 = arith.addf %12, %14 : vector<8x64xf32>
    %16 = vector.extract_strided_slice %15 {offsets = [0, 0], sizes = [8, 32], strides = [1, 1]} : vector<8x64xf32> to vector<8x32xf32>
    %17 = vector.extract_strided_slice %15 {offsets = [0, 32], sizes = [8, 32], strides = [1, 1]} : vector<8x64xf32> to vector<8x32xf32>
    %18 = vector.extract_strided_slice %10 {offsets = [0, 0], sizes = [8, 8], strides = [1, 1]} : vector<8x32xf32> to vector<8x8xf32>
    %19 = vector.extract_strided_slice %16 {offsets = [0, 0], sizes = [8, 8], strides = [1, 1]} : vector<8x32xf32> to vector<8x8xf32>
    %20 = vector.extract_strided_slice %17 {offsets = [0, 0], sizes = [8, 8], strides = [1, 1]} : vector<8x32xf32> to vector<8x8xf32>
    %cst_15 = arith.constant dense<0.000000e+00> : vector<8x8xf32>
    %21 = tpu.matmul %18, %19, %cst_15 {dimension_numbers = #tpu.dot_dimension_numbers<[1], [1], [0], [0], [0, 0, 1, 0], [], []>} : vector<8x8xf32>, vector<8x8xf32>, vector<8x8xf32> -> vector<8x8xf32>
    %cst_16 = arith.constant dense<0xFF800000> : vector<8xf32>
    %22 = vector.multi_reduction <maximumf>, %21, %cst_16 [1] : vector<8x8xf32> to vector<8xf32>
    %23 = vector.shape_cast %22 : vector<8xf32> to vector<8x1xf32>
    %24 = vector.broadcast %23 : vector<8x1xf32> to vector<8x8xf32>
    %25 = arith.subf %21, %24 : vector<8x8xf32>
    %26 = math.exp %25 : vector<8x8xf32>
    %cst_17 = arith.constant dense<0.000000e+00> : vector<8xf32>
    %27 = vector.multi_reduction <add>, %26, %cst_17 [1] : vector<8x8xf32> to vector<8xf32>
    %28 = vector.shape_cast %27 : vector<8xf32> to vector<8x1xf32>
    %29 = tpu.reciprocal %28 {approx = true} : vector<8x1xf32> -> vector<8x1xf32>
    %30 = vector.broadcast %29 : vector<8x1xf32> to vector<8x8xf32>
    %31 = arith.mulf %26, %30 : vector<8x8xf32>
    %cst_18 = arith.constant dense<0.000000e+00> : vector<8x8xf32>
    %32 = tpu.matmul %31, %20, %cst_18 {dimension_numbers = #tpu.dot_dimension_numbers<[1], [0], [0], [1], [0, 0, 1, 1], [], []>} : vector<8x8xf32>, vector<8x8xf32>, vector<8x8xf32> -> vector<8x8xf32>
    %33 = vector.extract_strided_slice %10 {offsets = [0, 8], sizes = [8, 8], strides = [1, 1]} : vector<8x32xf32> to vector<8x8xf32>
    %34 = vector.extract_strided_slice %16 {offsets = [0, 8], sizes = [8, 8], strides = [1, 1]} : vector<8x32xf32> to vector<8x8xf32>
    %35 = vector.extract_strided_slice %17 {offsets = [0, 8], sizes = [8, 8], strides = [1, 1]} : vector<8x32xf32> to vector<8x8xf32>
    %cst_19 = arith.constant dense<0.000000e+00> : vector<8x8xf32>
    %36 = tpu.matmul %33, %34, %cst_19 {dimension_numbers = #tpu.dot_dimension_numbers<[1], [1], [0], [0], [0, 0, 1, 0], [], []>} : vector<8x8xf32>, vector<8x8xf32>, vector<8x8xf32> -> vector<8x8xf32>
    %cst_20 = arith.constant dense<0xFF800000> : vector<8xf32>
    %37 = vector.multi_reduction <maximumf>, %36, %cst_20 [1] : vector<8x8xf32> to vector<8xf32>
    %38 = vector.shape_cast %37 : vector<8xf32> to vector<8x1xf32>
    %39 = vector.broadcast %38 : vector<8x1xf32> to vector<8x8xf32>
    %40 = arith.subf %36, %39 : vector<8x8xf32>
    %41 = math.exp %40 : vector<8x8xf32>
    %cst_21 = arith.constant dense<0.000000e+00> : vector<8xf32>
    %42 = vector.multi_reduction <add>, %41, %cst_21 [1] : vector<8x8xf32> to vector<8xf32>
    %43 = vector.shape_cast %42 : vector<8xf32> to vector<8x1xf32>
    %44 = tpu.reciprocal %43 {approx = true} : vector<8x1xf32> -> vector<8x1xf32>
    %45 = vector.broadcast %44 : vector<8x1xf32> to vector<8x8xf32>
    %46 = arith.mulf %41, %45 : vector<8x8xf32>
    %cst_22 = arith.constant dense<0.000000e+00> : vector<8x8xf32>
    %47 = tpu.matmul %46, %35, %cst_22 {dimension_numbers = #tpu.dot_dimension_numbers<[1], [0], [0], [1], [0, 0, 1, 1], [], []>} : vector<8x8xf32>, vector<8x8xf32>, vector<8x8xf32> -> vector<8x8xf32>
    %48 = vector.extract_strided_slice %10 {offsets = [0, 16], sizes = [8, 8], strides = [1, 1]} : vector<8x32xf32> to vector<8x8xf32>
    %49 = vector.extract_strided_slice %16 {offsets = [0, 16], sizes = [8, 8], strides = [1, 1]} : vector<8x32xf32> to vector<8x8xf32>
    %50 = vector.extract_strided_slice %17 {offsets = [0, 16], sizes = [8, 8], strides = [1, 1]} : vector<8x32xf32> to vector<8x8xf32>
    %cst_23 = arith.constant dense<0.000000e+00> : vector<8x8xf32>
    %51 = tpu.matmul %48, %49, %cst_23 {dimension_numbers = #tpu.dot_dimension_numbers<[1], [1], [0], [0], [0, 0, 1, 0], [], []>} : vector<8x8xf32>, vector<8x8xf32>, vector<8x8xf32> -> vector<8x8xf32>
    %cst_24 = arith.constant dense<0xFF800000> : vector<8xf32>
    %52 = vector.multi_reduction <maximumf>, %51, %cst_24 [1] : vector<8x8xf32> to vector<8xf32>
    %53 = vector.shape_cast %52 : vector<8xf32> to vector<8x1xf32>
    %54 = vector.broadcast %53 : vector<8x1xf32> to vector<8x8xf32>
    %55 = arith.subf %51, %54 : vector<8x8xf32>
    %56 = math.exp %55 : vector<8x8xf32>
    %cst_25 = arith.constant dense<0.000000e+00> : vector<8xf32>
    %57 = vector.multi_reduction <add>, %56, %cst_25 [1] : vector<8x8xf32> to vector<8xf32>
    %58 = vector.shape_cast %57 : vector<8xf32> to vector<8x1xf32>
    %59 = tpu.reciprocal %58 {approx = true} : vector<8x1xf32> -> vector<8x1xf32>
    %60 = vector.broadcast %59 : vector<8x1xf32> to vector<8x8xf32>
    %61 = arith.mulf %56, %60 : vector<8x8xf32>
    %cst_26 = arith.constant dense<0.000000e+00> : vector<8x8xf32>
    %62 = tpu.matmul %61, %50, %cst_26 {dimension_numbers = #tpu.dot_dimension_numbers<[1], [0], [0], [1], [0, 0, 1, 1], [], []>} : vector<8x8xf32>, vector<8x8xf32>, vector<8x8xf32> -> vector<8x8xf32>
    %63 = vector.extract_strided_slice %10 {offsets = [0, 24], sizes = [8, 8], strides = [1, 1]} : vector<8x32xf32> to vector<8x8xf32>
    %64 = vector.extract_strided_slice %16 {offsets = [0, 24], sizes = [8, 8], strides = [1, 1]} : vector<8x32xf32> to vector<8x8xf32>
    %65 = vector.extract_strided_slice %17 {offsets = [0, 24], sizes = [8, 8], strides = [1, 1]} : vector<8x32xf32> to vector<8x8xf32>
    %cst_27 = arith.constant dense<0.000000e+00> : vector<8x8xf32>
    %66 = tpu.matmul %63, %64, %cst_27 {dimension_numbers = #tpu.dot_dimension_numbers<[1], [1], [0], [0], [0, 0, 1, 0], [], []>} : vector<8x8xf32>, vector<8x8xf32>, vector<8x8xf32> -> vector<8x8xf32>
    %cst_28 = arith.constant dense<0xFF800000> : vector<8xf32>
    %67 = vector.multi_reduction <maximumf>, %66, %cst_28 [1] : vector<8x8xf32> to vector<8xf32>
    %68 = vector.shape_cast %67 : vector<8xf32> to vector<8x1xf32>
    %69 = vector.broadcast %68 : vector<8x1xf32> to vector<8x8xf32>
    %70 = arith.subf %66, %69 : vector<8x8xf32>
    %71 = math.exp %70 : vector<8x8xf32>
    %cst_29 = arith.constant dense<0.000000e+00> : vector<8xf32>
    %72 = vector.multi_reduction <add>, %71, %cst_29 [1] : vector<8x8xf32> to vector<8xf32>
    %73 = vector.shape_cast %72 : vector<8xf32> to vector<8x1xf32>
    %74 = tpu.reciprocal %73 {approx = true} : vector<8x1xf32> -> vector<8x1xf32>
    %75 = vector.broadcast %74 : vector<8x1xf32> to vector<8x8xf32>
    %76 = arith.mulf %71, %75 : vector<8x8xf32>
    %cst_30 = arith.constant dense<0.000000e+00> : vector<8x8xf32>
    %77 = tpu.matmul %76, %65, %cst_30 {dimension_numbers = #tpu.dot_dimension_numbers<[1], [0], [0], [1], [0, 0, 1, 1], [], []>} : vector<8x8xf32>, vector<8x8xf32>, vector<8x8xf32> -> vector<8x8xf32>
    %78 = tpu.concatenate %32, %47, %62, %77 in 1 : vector<8x8xf32>, vector<8x8xf32>, vector<8x8xf32>, vector<8x8xf32> -> vector<8x32xf32>
    %c0_31 = arith.constant 0 : index
    %c0_32 = arith.constant 0 : index
    %79 = vector.load %arg8[%c0_31, %c0_32] : memref<32x32xf32, #tpu.memory_space<vmem>>, vector<32x32xf32>
    %cst_33 = arith.constant dense<0.000000e+00> : vector<8x32xf32>
    %80 = tpu.matmul %78, %79, %cst_33 {dimension_numbers = #tpu.dot_dimension_numbers<[1], [0], [0], [1], [0, 0, 1, 1], [], []>} : vector<8x32xf32>, vector<32x32xf32>, vector<8x32xf32> -> vector<8x32xf32>
    %c0_34 = arith.constant 0 : index
    %c0_35 = arith.constant 0 : index
    %81 = vector.load %arg9[%c0_34, %c0_35] : memref<1x32xf32, #tpu.memory_space<vmem>>, vector<1x32xf32>
    %82 = vector.broadcast %81 : vector<1x32xf32> to vector<8x32xf32>
    %83 = arith.addf %80, %82 : vector<8x32xf32>
    %84 = arith.addf %1, %83 : vector<8x32xf32>
    %c0_36 = arith.constant 0 : index
    %c0_37 = arith.constant 0 : index
    %85 = vector.load %arg14[%c0_36, %c0_37] : memref<1x32xf32, #tpu.memory_space<vmem>>, vector<1x32xf32>
    %c0_38 = arith.constant 0 : index
    %c0_39 = arith.constant 0 : index
    %86 = vector.load %arg15[%c0_38, %c0_39] : memref<1x32xf32, #tpu.memory_space<vmem>>, vector<1x32xf32>
    %cst_40 = arith.constant dense<0.000000e+00> : vector<8xf32>
    %87 = vector.multi_reduction <add>, %84, %cst_40 [1] : vector<8x32xf32> to vector<8xf32>
    %88 = vector.shape_cast %87 : vector<8xf32> to vector<8x1xf32>
    %cst_41 = arith.constant 3.200000e+01 : f32
    %89 = vector.broadcast %cst_41 : f32 to vector<8x1xf32>
    %90 = arith.divf %88, %89 : vector<8x1xf32>
    %91 = vector.broadcast %90 : vector<8x1xf32> to vector<8x32xf32>
    %92 = arith.subf %84, %91 : vector<8x32xf32>
    %93 = arith.mulf %92, %92 : vector<8x32xf32>
    %cst_42 = arith.constant dense<0.000000e+00> : vector<8xf32>
    %94 = vector.multi_reduction <add>, %93, %cst_42 [1] : vector<8x32xf32> to vector<8xf32>
    %95 = vector.shape_cast %94 : vector<8xf32> to vector<8x1xf32>
    %cst_43 = arith.constant 3.200000e+01 : f32
    %96 = vector.broadcast %cst_43 : f32 to vector<8x1xf32>
    %97 = arith.divf %95, %96 : vector<8x1xf32>
    %98 = vector.broadcast %90 : vector<8x1xf32> to vector<8x32xf32>
    %99 = arith.subf %84, %98 : vector<8x32xf32>
    %cst_44 = arith.constant 9.99999974E-6 : f32
    %100 = vector.broadcast %cst_44 : f32 to vector<8x1xf32>
    %101 = arith.addf %97, %100 : vector<8x1xf32>
    %102 = math.rsqrt %101 : vector<8x1xf32>
    %103 = vector.broadcast %102 : vector<8x1xf32> to vector<8x32xf32>
    %104 = arith.mulf %99, %103 : vector<8x32xf32>
    %105 = vector.broadcast %85 : vector<1x32xf32> to vector<8x32xf32>
    %106 = arith.mulf %104, %105 : vector<8x32xf32>
    %107 = vector.broadcast %86 : vector<1x32xf32> to vector<8x32xf32>
    %108 = arith.addf %106, %107 : vector<8x32xf32>
    %c0_45 = arith.constant 0 : index
    %c0_46 = arith.constant 0 : index
    %109 = vector.load %arg10[%c0_45, %c0_46] : memref<32x64xf32, #tpu.memory_space<vmem>>, vector<32x64xf32>
    %cst_47 = arith.constant dense<0.000000e+00> : vector<8x64xf32>
    %110 = tpu.matmul %108, %109, %cst_47 {dimension_numbers = #tpu.dot_dimension_numbers<[1], [0], [0], [1], [0, 0, 1, 1], [], []>} : vector<8x32xf32>, vector<32x64xf32>, vector<8x64xf32> -> vector<8x64xf32>
    %c0_48 = arith.constant 0 : index
    %c0_49 = arith.constant 0 : index
    %111 = vector.load %arg11[%c0_48, %c0_49] : memref<1x64xf32, #tpu.memory_space<vmem>>, vector<1x64xf32>
    %112 = vector.broadcast %111 : vector<1x64xf32> to vector<8x64xf32>
    %113 = arith.addf %110, %112 : vector<8x64xf32>
    %cst_50 = arith.constant 0.000000e+00 : f32
    %114 = vector.broadcast %cst_50 : f32 to vector<8x64xf32>
    %115 = arith.maximumf %113, %114 : vector<8x64xf32>
    %c0_51 = arith.constant 0 : index
    %c0_52 = arith.constant 0 : index
    %116 = vector.load %arg12[%c0_51, %c0_52] : memref<64x32xf32, #tpu.memory_space<vmem>>, vector<64x32xf32>
    %cst_53 = arith.constant dense<0.000000e+00> : vector<8x32xf32>
    %117 = tpu.matmul %115, %116, %cst_53 {dimension_numbers = #tpu.dot_dimension_numbers<[1], [0], [0], [1], [0, 0, 1, 1], [], []>} : vector<8x64xf32>, vector<64x32xf32>, vector<8x32xf32> -> vector<8x32xf32>
    %c0_54 = arith.constant 0 : index
    %c0_55 = arith.constant 0 : index
    %118 = vector.load %arg13[%c0_54, %c0_55] : memref<1x32xf32, #tpu.memory_space<vmem>>, vector<1x32xf32>
    %119 = vector.broadcast %118 : vector<1x32xf32> to vector<8x32xf32>
    %120 = arith.addf %117, %119 : vector<8x32xf32>
    %121 = arith.addf %108, %120 : vector<8x32xf32>
    %c0_56 = arith.constant 0 : index
    %c0_57 = arith.constant 0 : index
    %122 = vector.load %arg16[%c0_56, %c0_57] : memref<1x32xf32, #tpu.memory_space<vmem>>, vector<1x32xf32>
    %c0_58 = arith.constant 0 : index
    %c0_59 = arith.constant 0 : index
    %123 = vector.load %arg17[%c0_58, %c0_59] : memref<1x32xf32, #tpu.memory_space<vmem>>, vector<1x32xf32>
    %cst_60 = arith.constant dense<0.000000e+00> : vector<8xf32>
    %124 = vector.multi_reduction <add>, %121, %cst_60 [1] : vector<8x32xf32> to vector<8xf32>
    %125 = vector.shape_cast %124 : vector<8xf32> to vector<8x1xf32>
    %cst_61 = arith.constant 3.200000e+01 : f32
    %126 = vector.broadcast %cst_61 : f32 to vector<8x1xf32>
    %127 = arith.divf %125, %126 : vector<8x1xf32>
    %128 = vector.broadcast %127 : vector<8x1xf32> to vector<8x32xf32>
    %129 = arith.subf %121, %128 : vector<8x32xf32>
    %130 = arith.mulf %129, %129 : vector<8x32xf32>
    %cst_62 = arith.constant dense<0.000000e+00> : vector<8xf32>
    %131 = vector.multi_reduction <add>, %130, %cst_62 [1] : vector<8x32xf32> to vector<8xf32>
    %132 = vector.shape_cast %131 : vector<8xf32> to vector<8x1xf32>
    %cst_63 = arith.constant 3.200000e+01 : f32
    %133 = vector.broadcast %cst_63 : f32 to vector<8x1xf32>
    %134 = arith.divf %132, %133 : vector<8x1xf32>
    %135 = vector.broadcast %127 : vector<8x1xf32> to vector<8x32xf32>
    %136 = arith.subf %121, %135 : vector<8x32xf32>
    %cst_64 = arith.constant 9.99999974E-6 : f32
    %137 = vector.broadcast %cst_64 : f32 to vector<8x1xf32>
    %138 = arith.addf %134, %137 : vector<8x1xf32>
    %139 = math.rsqrt %138 : vector<8x1xf32>
    %140 = vector.broadcast %139 : vector<8x1xf32> to vector<8x32xf32>
    %141 = arith.mulf %136, %140 : vector<8x32xf32>
    %142 = vector.broadcast %122 : vector<1x32xf32> to vector<8x32xf32>
    %143 = arith.mulf %141, %142 : vector<8x32xf32>
    %144 = vector.broadcast %123 : vector<1x32xf32> to vector<8x32xf32>
    %145 = arith.addf %143, %144 : vector<8x32xf32>
    %c0_65 = arith.constant 0 : index
    %c0_66 = arith.constant 0 : index
    %c0_67 = arith.constant 0 : index
    %146 = vector.load %arg18[%c0_65, %c0_66, %c0_67] : memref<1x8x32xf32, #tpu.memory_space<vmem>>, vector<1x8x32xf32>
    %147 = vector.shape_cast %146 : vector<1x8x32xf32> to vector<8x32xf32>
    %148 = vector.shape_cast %145 : vector<8x32xf32> to vector<1x8x32xf32>
    tpu.vector_store %arg18[%c0_65, %c0_66, %c0_67], %148 {strides = array<i32>} : memref<1x8x32xf32, #tpu.memory_space<vmem>>, vector<1x8x32xf32>,
    return
  }
  func.func @transform_0(%arg0: i32, %arg1: i32) -> (i32, i32, i32) {
    %c0_i32 = arith.constant 0 : i32
    %c0_i32_0 = arith.constant 0 : i32
    return %arg0, %arg1, %c0_i32 : i32, i32, i32
  }
  func.func @transform_1(%arg0: i32, %arg1: i32) -> (i32, i32, i32) {
    %c0_i32 = arith.constant 0 : i32
    %c0_i32_0 = arith.constant 0 : i32
    %c0_i32_1 = arith.constant 0 : i32
    return %arg0, %c0_i32, %c0_i32_0 : i32, i32, i32
  }
  func.func @transform_2(%arg0: i32, %arg1: i32) -> (i32, i32) {
    %c0_i32 = arith.constant 0 : i32
    %c0_i32_0 = arith.constant 0 : i32
    %c0_i32_1 = arith.constant 0 : i32
    return %c0_i32, %c0_i32_0 : i32, i32
  }
  func.func @transform_3(%arg0: i32, %arg1: i32) -> (i32, i32) {
    %c0_i32 = arith.constant 0 : i32
    %c0_i32_0 = arith.constant 0 : i32
    %c0_i32_1 = arith.constant 0 : i32
    return %c0_i32, %c0_i32_0 : i32, i32
  }
  func.func @transform_4(%arg0: i32, %arg1: i32) -> (i32, i32) {
    %c0_i32 = arith.constant 0 : i32
    %c0_i32_0 = arith.constant 0 : i32
    %c0_i32_1 = arith.constant 0 : i32
    return %c0_i32, %c0_i32_0 : i32, i32
  }
  func.func @transform_5(%arg0: i32, %arg1: i32) -> (i32, i32) {
    %c0_i32 = arith.constant 0 : i32
    %c0_i32_0 = arith.constant 0 : i32
    %c0_i32_1 = arith.constant 0 : i32
    return %c0_i32, %c0_i32_0 : i32, i32
  }
  func.func @transform_6(%arg0: i32, %arg1: i32) -> (i32, i32) {
    %c0_i32 = arith.constant 0 : i32
    %c0_i32_0 = arith.constant 0 : i32
    %c0_i32_1 = arith.constant 0 : i32
    return %c0_i32, %c0_i32_0 : i32, i32
  }
  func.func @transform_7(%arg0: i32, %arg1: i32) -> (i32, i32) {
    %c0_i32 = arith.constant 0 : i32
    %c0_i32_0 = arith.constant 0 : i32
    %c0_i32_1 = arith.constant 0 : i32
    return %c0_i32, %c0_i32_0 : i32, i32
  }
  func.func @transform_8(%arg0: i32, %arg1: i32) -> (i32, i32) {
    %c0_i32 = arith.constant 0 : i32
    %c0_i32_0 = arith.constant 0 : i32
    %c0_i32_1 = arith.constant 0 : i32
    return %c0_i32, %c0_i32_0 : i32, i32
  }
  func.func @transform_9(%arg0: i32, %arg1: i32) -> (i32, i32) {
    %c0_i32 = arith.constant 0 : i32
    %c0_i32_0 = arith.constant 0 : i32
    %c0_i32_1 = arith.constant 0 : i32
    return %c0_i32, %c0_i32_0 : i32, i32
  }
  func.func @transform_10(%arg0: i32, %arg1: i32) -> (i32, i32) {
    %c0_i32 = arith.constant 0 : i32
    %c0_i32_0 = arith.constant 0 : i32
    %c0_i32_1 = arith.constant 0 : i32
    return %c0_i32, %c0_i32_0 : i32, i32
  }
  func.func @transform_11(%arg0: i32, %arg1: i32) -> (i32, i32) {
    %c0_i32 = arith.constant 0 : i32
    %c0_i32_0 = arith.constant 0 : i32
    %c0_i32_1 = arith.constant 0 : i32
    return %c0_i32, %c0_i32_0 : i32, i32
  }
  func.func @transform_12(%arg0: i32, %arg1: i32) -> (i32, i32) {
    %c0_i32 = arith.constant 0 : i32
    %c0_i32_0 = arith.constant 0 : i32
    %c0_i32_1 = arith.constant 0 : i32
    return %c0_i32, %c0_i32_0 : i32, i32
  }
  func.func @transform_13(%arg0: i32, %arg1: i32) -> (i32, i32) {
    %c0_i32 = arith.constant 0 : i32
    %c0_i32_0 = arith.constant 0 : i32
    %c0_i32_1 = arith.constant 0 : i32
    return %c0_i32, %c0_i32_0 : i32, i32
  }
  func.func @transform_14(%arg0: i32, %arg1: i32) -> (i32, i32) {
    %c0_i32 = arith.constant 0 : i32
    %c0_i32_0 = arith.constant 0 : i32
    %c0_i32_1 = arith.constant 0 : i32
    return %c0_i32, %c0_i32_0 : i32, i32
  }
  func.func @transform_15(%arg0: i32, %arg1: i32) -> (i32, i32) {
    %c0_i32 = arith.constant 0 : i32
    %c0_i32_0 = arith.constant 0 : i32
    %c0_i32_1 = arith.constant 0 : i32
    return %c0_i32, %c0_i32_0 : i32, i32
  }
  func.func @transform_16(%arg0: i32, %arg1: i32) -> (i32, i32, i32) {
    %c0_i32 = arith.constant 0 : i32
    %c0_i32_0 = arith.constant 0 : i32
    return %arg0, %arg1, %c0_i32 : i32, i32, i32
  }
}

</mosaic_0001>

<llo_original>
// kernel: tpu_custom_call.1
$region0: #{tpu_custom_call.1}
  #allocation0 [shape = 'u32[]', space=smem, size = 0x4, offset = 0x4, fixed_abs, tag = 'smem constant byte address 0x4 - core index']
  #allocation1 [shape = 'u32[144,128]{1,0:T(1,128)}', space=vmem, size = 0x12000, scoped, tag = 'internal scratch']
  %s0 = inlined_call_operand.hbm [shape: f32[2,8,32], index: 0, kind: input, shape index: {}]
  %s1 = inlined_call_operand.hbm [shape: f32[2,8,32], index: 1, kind: input, shape index: {}]
  %s2 = inlined_call_operand.vmem [shape: f32[32,32], index: 2, kind: input, shape index: {}]
  %s3 = inlined_call_operand.vmem [shape: f32[1,32], index: 3, kind: input, shape index: {}]
  %s4 = inlined_call_operand.vmem [shape: f32[32,64], index: 4, kind: input, shape index: {}]
  %s5 = inlined_call_operand.vmem [shape: f32[1,64], index: 5, kind: input, shape index: {}]
  %s6 = inlined_call_operand.vmem [shape: f32[32,32], index: 6, kind: input, shape index: {}]
  %s7 = inlined_call_operand.vmem [shape: f32[1,32], index: 7, kind: input, shape index: {}]
  %s8 = inlined_call_operand.hbm [shape: f32[32,64], index: 8, kind: input, shape index: {}]
  %s9 = inlined_call_operand.vmem [shape: f32[1,64], index: 9, kind: input, shape index: {}]
  %s10 = inlined_call_operand.vmem [shape: f32[64,32], index: 10, kind: input, shape index: {}]
  %s11 = inlined_call_operand.vmem [shape: f32[1,32], index: 11, kind: input, shape index: {}]
  %s12 = inlined_call_operand.vmem [shape: f32[1,32], index: 12, kind: input, shape index: {}]
  %s13 = inlined_call_operand.vmem [shape: f32[1,32], index: 13, kind: input, shape index: {}]
  %s14 = inlined_call_operand.vmem [shape: f32[1,32], index: 14, kind: input, shape index: {}]
  %s15 = inlined_call_operand.vmem [shape: f32[1,32], index: 15, kind: input, shape index: {}]
  %s16 = inlined_call_operand.hbm [shape: f32[2,8,32], index: 16, kind: output, shape index: {}]
  %s17 = sld [smem:[#allocation0]]
  $region109: #{tpu_custom_call.1} parent=0
    _
  %s19 = ssub.s32 1, %s17
  %s20 = scalar_select 0, %s19, %s17
  $region1: #{tpu_custom_call.1} parent=0
    #allocation2 [shape = 'u8[8192]{0}', space=vmem, size = 0x2000, scoped, tag = 'input window, operand 0']
    #allocation3 [shape = 's32[2]{0}', space=sflag, size = 0x8, scoped, tag = 'scoped memory for tpu_custom_call.1']
    #allocation4 [shape = 's32[2]{0}', space=sflag, size = 0x8, scoped, tag = 'scoped memory for tpu_custom_call.1']
    #allocation5 [shape = 'u8[8192]{0}', space=vmem, size = 0x2000, scoped, tag = 'input window, operand 1']
    #allocation6 [shape = 's32[2]{0}', space=sflag, size = 0x8, scoped, tag = 'scoped memory for tpu_custom_call.1']
    #allocation7 [shape = 'u8[16384]{0}', space=vmem, size = 0x4000, scoped, tag = 'input window, operand 8, single buffered']
    #allocation8 [shape = 'u8[8192]{0}', space=vmem, size = 0x2000, scoped, tag = 'output window, operand 0']
    %21 = vsyncpa [#allocation3], 0
    %s22 = scalar_lea.sflag [#allocation3], 1
    %23 = vsyncpa %s22, 0
    %24 = vsyncpa [#allocation6], 0
    %s25 = scalar_lea.sflag [#allocation6], 1
    %26 = vsyncpa %s25, 0
    %27 = vsyncpa [#allocation4], 0
    %s28 = scalar_lea.sflag [#allocation4], 1
    %29 = vsyncpa %s28, 0
    loop: start=0, step=1, limit=4
    $region2: #{tpu_custom_call.1} parent=1 // loop_pre_header
      _
    $region3: #{tpu_custom_call.1} parent=1 // loop_header
      %s31 = sphi 0, %s35
      %p32 = scmp.ge.s32.totalorder %s31, 4
      %s38 = sphi 0, %s50
      %s39 = sphi 0, %s46
      %s40 = sphi 0, %s38
      %s41 = sphi 0, %s39
      %s42 = sphi 0, %s40
      %s43 = sphi 0, %s41
      %s55 = sphi 0, %s57
      %s58 = sphi 0, %s55
      %s59 = sphi 0, %s58
      %s75 = sphi 0, %s59
      %s81 = sphi 0, %s83
      %s84 = sphi 0, %s81
      %s85 = sphi 0, %s84
      %s101 = sphi 0, %s85
      %s105 = sphi 0, %s105
      %s107 = sphi 0, %s105
      %s108 = sphi 0, %s107
      %s122 = sphi 0, %s108
      %s126 = sphi 0, %s126
      %s128 = sphi 0, %s126
      %s129 = sphi 0, %s128
      %s143 = sphi 0, %s129
      %s147 = sphi 0, %s147
      %s149 = sphi 0, %s147
      %s150 = sphi 0, %s149
      %s164 = sphi 0, %s150
      %s168 = sphi 0, %s168
      %s170 = sphi 0, %s168
      %s171 = sphi 0, %s170
      %s185 = sphi 0, %s171
      %s189 = sphi 0, %s189
      %s191 = sphi 0, %s189
      %s192 = sphi 0, %s191
      %s206 = sphi 0, %s192
      %s210 = sphi 0, %s210
      %s212 = sphi 0, %s210
      %s213 = sphi 0, %s212
      %s227 = sphi 0, %s213
      %s231 = sphi 0, %s231
      %s233 = sphi 0, %s231
      %s234 = sphi 0, %s233
      %s248 = sphi 0, %s234
      %s252 = sphi 0, %s252
      %s254 = sphi 0, %s252
      %s255 = sphi 0, %s254
      %s269 = sphi 0, %s255
      %s273 = sphi 0, %s273
      %s275 = sphi 0, %s273
      %s276 = sphi 0, %s275
      %s290 = sphi 0, %s276
      %s294 = sphi 0, %s294
      %s296 = sphi 0, %s294
      %s297 = sphi 0, %s296
      %s311 = sphi 0, %s297
      %s315 = sphi 0, %s315
      %s317 = sphi 0, %s315
      %s318 = sphi 0, %s317
      %s332 = sphi 0, %s318
      %s336 = sphi 0, %s336
      %s338 = sphi 0, %s336
      %s339 = sphi 0, %s338
      %s353 = sphi 0, %s339
      %s357 = sphi 0, %s357
      %s359 = sphi 0, %s357
      %s360 = sphi 0, %s359
      %s374 = sphi 0, %s360
      %s378 = sphi 0, %s378
      %s380 = sphi 0, %s378
      %s381 = sphi 0, %s380
      %s395 = sphi 0, %s381
      %s403 = sphi 0, %s405
      %s406 = sphi 0, %s403
      %s407 = sphi 0, %s406
      %s423 = sphi 0, %s407
    $region4: #{tpu_custom_call.1} parent=1 // loop_header_branch
      %34 = sbr.rel (%p32) target = $region8
    $region5: #{tpu_custom_call.1} parent=1 // loop_body
      %s36 = ssub.s32 %s31, 1
      %s37 = ssub.s32 %s31, 2
      %s44 = sadd.s32 1, %s39
      %p45 = scmp.ge.s32.totalorder %s44, 1
      %s46 = scalar_select %p45, 0, %s44
      %s47 = sadd.s32 1, %s38
      %s48 = scalar_select %p45, %s47, %s38
      %p49 = scmp.ge.s32.totalorder %s48, 2
      %s50 = scalar_select %p49, 0, %s48
      %s51 = ssub.s32 %s38, %s50
      %s52 = ssub.s32 %s39, %s46
      %s53 = sor.u32 %s51, %s52
      %p54 = scmp.eq.s32.totalorder %s53, 0
      %s56 = sadd.s32 %s55, 1
      %s57 = scalar_select %p54, %s55, %s56
      %p60 = pneg %p54
      %p61 = scmp.eq.s32.totalorder %s31, 1
      %p62 = por %p60, %p61
      %p63 = scmp.ne.s32.totalorder %s55, %s58
      %p64 = scmp.eq.s32.totalorder %s31, 0
      %p65 = por %p63, %p64
      %p66 = scmp.ne.s32.totalorder %s55, %s58
      %p67 = scmp.eq.s32.totalorder %s36, 1
      %p68 = por %p66, %p67
      %p69 = scmp.ne.s32.totalorder %s58, %s59
      %p70 = scmp.eq.s32.totalorder %s36, 0
      %p71 = por %p69, %p70
      %p72 = scmp.ne.s32.totalorder %s58, %s59
      %p73 = scmp.eq.s32.totalorder %s37, 1
      %p74 = por %p72, %p73
      %p76 = scmp.ne.s32.totalorder %s59, %s75
      %p77 = scmp.eq.s32.totalorder %s37, 0
      %p78 = por %p76, %p77
      %s79 = ssub.s32 %s38, %s50
      %p80 = scmp.eq.s32.totalorder %s79, 0
      %s82 = sadd.s32 %s81, 1
      %s83 = scalar_select %p80, %s81, %s82
      %p86 = pneg %p80
      %p87 = scmp.eq.s32.totalorder %s31, 1
      %p88 = por %p86, %p87
      %p89 = scmp.ne.s32.totalorder %s81, %s84
      %p90 = scmp.eq.s32.totalorder %s31, 0
      %p91 = por %p89, %p90
      %p92 = scmp.ne.s32.totalorder %s81, %s84
      %p93 = scmp.eq.s32.totalorder %s36, 1
      %p94 = por %p92, %p93
      %p95 = scmp.ne.s32.totalorder %s84, %s85
      %p96 = scmp.eq.s32.totalorder %s36, 0
      %p97 = por %p95, %p96
      %p98 = scmp.ne.s32.totalorder %s84, %s85
      %p99 = scmp.eq.s32.totalorder %s37, 1
      %p100 = por %p98, %p99
      %p102 = scmp.ne.s32.totalorder %s85, %s101
      %p103 = scmp.eq.s32.totalorder %s37, 0
      %p104 = por %p102, %p103
      %s106 = sadd.s32 %s105, 1
      %p109 = scmp.eq.s32.totalorder %s31, 1
      %p110 = scmp.ne.s32.totalorder %s105, %s107
      %p111 = scmp.eq.s32.totalorder %s31, 0
      %p112 = por %p110, %p111
      %p113 = scmp.ne.s32.totalorder %s105, %s107
      %p114 = scmp.eq.s32.totalorder %s36, 1
      %p115 = por %p113, %p114
      %p116 = scmp.ne.s32.totalorder %s107, %s108
      %p117 = scmp.eq.s32.totalorder %s36, 0
      %p118 = por %p116, %p117
      %p119 = scmp.ne.s32.totalorder %s107, %s108
      %p120 = scmp.eq.s32.totalorder %s37, 1
      %p121 = por %p119, %p120
      %p123 = scmp.ne.s32.totalorder %s108, %s122
      %p124 = scmp.eq.s32.totalorder %s37, 0
      %p125 = por %p123, %p124
      %s127 = sadd.s32 %s126, 1
      %p130 = scmp.eq.s32.totalorder %s31, 1
      %p131 = scmp.ne.s32.totalorder %s126, %s128
      %p132 = scmp.eq.s32.totalorder %s31, 0
      %p133 = por %p131, %p132
      %p134 = scmp.ne.s32.totalorder %s126, %s128
      %p135 = scmp.eq.s32.totalorder %s36, 1
      %p136 = por %p134, %p135
      %p137 = scmp.ne.s32.totalorder %s128, %s129
      %p138 = scmp.eq.s32.totalorder %s36, 0
      %p139 = por %p137, %p138
      %p140 = scmp.ne.s32.totalorder %s128, %s129
      %p141 = scmp.eq.s32.totalorder %s37, 1
      %p142 = por %p140, %p141
      %p144 = scmp.ne.s32.totalorder %s129, %s143
      %p145 = scmp.eq.s32.totalorder %s37, 0
      %p146 = por %p144, %p145
      %s148 = sadd.s32 %s147, 1
      %p151 = scmp.eq.s32.totalorder %s31, 1
      %p152 = scmp.ne.s32.totalorder %s147, %s149
      %p153 = scmp.eq.s32.totalorder %s31, 0
      %p154 = por %p152, %p153
      %p155 = scmp.ne.s32.totalorder %s147, %s149
      %p156 = scmp.eq.s32.totalorder %s36, 1
      %p157 = por %p155, %p156
      %p158 = scmp.ne.s32.totalorder %s149, %s150
      %p159 = scmp.eq.s32.totalorder %s36, 0
      %p160 = por %p158, %p159
      %p161 = scmp.ne.s32.totalorder %s149, %s150
      %p162 = scmp.eq.s32.totalorder %s37, 1
      %p163 = por %p161, %p162
      %p165 = scmp.ne.s32.totalorder %s150, %s164
      %p166 = scmp.eq.s32.totalorder %s37, 0
      %p167 = por %p165, %p166
      %s169 = sadd.s32 %s168, 1
      %p172 = scmp.eq.s32.totalorder %s31, 1
      %p173 = scmp.ne.s32.totalorder %s168, %s170
      %p174 = scmp.eq.s32.totalorder %s31, 0
      %p175 = por %p173, %p174
      %p176 = scmp.ne.s32.totalorder %s168, %s170
      %p177 = scmp.eq.s32.totalorder %s36, 1
      %p178 = por %p176, %p177
      %p179 = scmp.ne.s32.totalorder %s170, %s171
      %p180 = scmp.eq.s32.totalorder %s36, 0
      %p181 = por %p179, %p180
      %p182 = scmp.ne.s32.totalorder %s170, %s171
      %p183 = scmp.eq.s32.totalorder %s37, 1
      %p184 = por %p182, %p183
      %p186 = scmp.ne.s32.totalorder %s171, %s185
      %p187 = scmp.eq.s32.totalorder %s37, 0
      %p188 = por %p186, %p187
      %s190 = sadd.s32 %s189, 1
      %p193 = scmp.eq.s32.totalorder %s31, 1
      %p194 = scmp.ne.s32.totalorder %s189, %s191
      %p195 = scmp.eq.s32.totalorder %s31, 0
      %p196 = por %p194, %p195
      %p197 = scmp.ne.s32.totalorder %s189, %s191
      %p198 = scmp.eq.s32.totalorder %s36, 1
      %p199 = por %p197, %p198
      %p200 = scmp.ne.s32.totalorder %s191, %s192
      %p201 = scmp.eq.s32.totalorder %s36, 0
      %p202 = por %p200, %p201
      %p203 = scmp.ne.s32.totalorder %s191, %s192
      %p204 = scmp.eq.s32.totalorder %s37, 1
      %p205 = por %p203, %p204
      %p207 = scmp.ne.s32.totalorder %s192, %s206
      %p208 = scmp.eq.s32.totalorder %s37, 0
      %p209 = por %p207, %p208
      %s211 = sadd.s32 %s210, 1
      %p214 = scmp.eq.s32.totalorder %s31, 1
      %p215 = scmp.ne.s32.totalorder %s210, %s212
      %p216 = scmp.eq.s32.totalorder %s31, 0
      %p217 = por %p215, %p216
      %p218 = scmp.ne.s32.totalorder %s210, %s212
      %p219 = scmp.eq.s32.totalorder %s36, 1
      %p220 = por %p218, %p219
      %p221 = scmp.ne.s32.totalorder %s212, %s213
      %p222 = scmp.eq.s32.totalorder %s36, 0
      %p223 = por %p221, %p222
      %p224 = scmp.ne.s32.totalorder %s212, %s213
      %p225 = scmp.eq.s32.totalorder %s37, 1
      %p226 = por %p224, %p225
      %p228 = scmp.ne.s32.totalorder %s213, %s227
      %p229 = scmp.eq.s32.totalorder %s37, 0
      %p230 = por %p228, %p229
      %s232 = sadd.s32 %s231, 1
      %p235 = scmp.eq.s32.totalorder %s31, 1
      %p236 = scmp.ne.s32.totalorder %s231, %s233
      %p237 = scmp.eq.s32.totalorder %s31, 0
      %p238 = por %p236, %p237
      %p239 = scmp.ne.s32.totalorder %s231, %s233
      %p240 = scmp.eq.s32.totalorder %s36, 1
      %p241 = por %p239, %p240
      %p242 = scmp.ne.s32.totalorder %s233, %s234
      %p243 = scmp.eq.s32.totalorder %s36, 0
      %p244 = por %p242, %p243
      %p245 = scmp.ne.s32.totalorder %s233, %s234
      %p246 = scmp.eq.s32.totalorder %s37, 1
      %p247 = por %p245, %p246
      %p249 = scmp.ne.s32.totalorder %s234, %s248
      %p250 = scmp.eq.s32.totalorder %s37, 0
      %p251 = por %p249, %p250
      %s253 = sadd.s32 %s252, 1
      %p256 = scmp.eq.s32.totalorder %s31, 1
      %p257 = scmp.ne.s32.totalorder %s252, %s254
      %p258 = scmp.eq.s32.totalorder %s31, 0
      %p259 = por %p257, %p258
      %p260 = scmp.ne.s32.totalorder %s252, %s254
      %p261 = scmp.eq.s32.totalorder %s36, 1
      %p262 = por %p260, %p261
      %p263 = scmp.ne.s32.totalorder %s254, %s255
      %p264 = scmp.eq.s32.totalorder %s36, 0
      %p265 = por %p263, %p264
      %p266 = scmp.ne.s32.totalorder %s254, %s255
      %p267 = scmp.eq.s32.totalorder %s37, 1
      %p268 = por %p266, %p267
      %p270 = scmp.ne.s32.totalorder %s255, %s269
      %p271 = scmp.eq.s32.totalorder %s37, 0
      %p272 = por %p270, %p271
      %s274 = sadd.s32 %s273, 1
      %p277 = scmp.eq.s32.totalorder %s31, 1
      %p278 = scmp.ne.s32.totalorder %s273, %s275
      %p279 = scmp.eq.s32.totalorder %s31, 0
      %p280 = por %p278, %p279
      %p281 = scmp.ne.s32.totalorder %s273, %s275
      %p282 = scmp.eq.s32.totalorder %s36, 1
      %p283 = por %p281, %p282
      %p284 = scmp.ne.s32.totalorder %s275, %s276
      %p285 = scmp.eq.s32.totalorder %s36, 0
      %p286 = por %p284, %p285
      %p287 = scmp.ne.s32.totalorder %s275, %s276
      %p288 = scmp.eq.s32.totalorder %s37, 1
      %p289 = por %p287, %p288
      %p291 = scmp.ne.s32.totalorder %s276, %s290
      %p292 = scmp.eq.s32.totalorder %s37, 0
      %p293 = por %p291, %p292
      %s295 = sadd.s32 %s294, 1
      %p298 = scmp.eq.s32.totalorder %s31, 1
      %p299 = scmp.ne.s32.totalorder %s294, %s296
      %p300 = scmp.eq.s32.totalorder %s31, 0
      %p301 = por %p299, %p300
      %p302 = scmp.ne.s32.totalorder %s294, %s296
      %p303 = scmp.eq.s32.totalorder %s36, 1
      %p304 = por %p302, %p303
      %p305 = scmp.ne.s32.totalorder %s296, %s297
      %p306 = scmp.eq.s32.totalorder %s36, 0
      %p307 = por %p305, %p306
      %p308 = scmp.ne.s32.totalorder %s296, %s297
      %p309 = scmp.eq.s32.totalorder %s37, 1
      %p310 = por %p308, %p309
      %p312 = scmp.ne.s32.totalorder %s297, %s311
      %p313 = scmp.eq.s32.totalorder %s37, 0
      %p314 = por %p312, %p313
      %s316 = sadd.s32 %s315, 1
      %p319 = scmp.eq.s32.totalorder %s31, 1
      %p320 = scmp.ne.s32.totalorder %s315, %s317
      %p321 = scmp.eq.s32.totalorder %s31, 0
      %p322 = por %p320, %p321
      %p323 = scmp.ne.s32.totalorder %s315, %s317
      %p324 = scmp.eq.s32.totalorder %s36, 1
      %p325 = por %p323, %p324
      %p326 = scmp.ne.s32.totalorder %s317, %s318
      %p327 = scmp.eq.s32.totalorder %s36, 0
      %p328 = por %p326, %p327
      %p329 = scmp.ne.s32.totalorder %s317, %s318
      %p330 = scmp.eq.s32.totalorder %s37, 1
      %p331 = por %p329, %p330
      %p333 = scmp.ne.s32.totalorder %s318, %s332
      %p334 = scmp.eq.s32.totalorder %s37, 0
      %p335 = por %p333, %p334
      %s337 = sadd.s32 %s336, 1
      %p340 = scmp.eq.s32.totalorder %s31, 1
      %p341 = scmp.ne.s32.totalorder %s336, %s338
      %p342 = scmp.eq.s32.totalorder %s31, 0
      %p343 = por %p341, %p342
      %p344 = scmp.ne.s32.totalorder %s336, %s338
      %p345 = scmp.eq.s32.totalorder %s36, 1
      %p346 = por %p344, %p345
      %p347 = scmp.ne.s32.totalorder %s338, %s339
      %p348 = scmp.eq.s32.totalorder %s36, 0
      %p349 = por %p347, %p348
      %p350 = scmp.ne.s32.totalorder %s338, %s339
      %p351 = scmp.eq.s32.totalorder %s37, 1
      %p352 = por %p350, %p351
      %p354 = scmp.ne.s32.totalorder %s339, %s353
      %p355 = scmp.eq.s32.totalorder %s37, 0
      %p356 = por %p354, %p355
      %s358 = sadd.s32 %s357, 1
      %p361 = scmp.eq.s32.totalorder %s31, 1
      %p362 = scmp.ne.s32.totalorder %s357, %s359
      %p363 = scmp.eq.s32.totalorder %s31, 0
      %p364 = por %p362, %p363
      %p365 = scmp.ne.s32.totalorder %s357, %s359
      %p366 = scmp.eq.s32.totalorder %s36, 1
      %p367 = por %p365, %p366
      %p368 = scmp.ne.s32.totalorder %s359, %s360
      %p369 = scmp.eq.s32.totalorder %s36, 0
      %p370 = por %p368, %p369
      %p371 = scmp.ne.s32.totalorder %s359, %s360
      %p372 = scmp.eq.s32.totalorder %s37, 1
      %p373 = por %p371, %p372
      %p375 = scmp.ne.s32.totalorder %s360, %s374
      %p376 = scmp.eq.s32.totalorder %s37, 0
      %p377 = por %p375, %p376
      %s379 = sadd.s32 %s378, 1
      %p382 = scmp.eq.s32.totalorder %s31, 1
      %p383 = scmp.ne.s32.totalorder %s378, %s380
      %p384 = scmp.eq.s32.totalorder %s31, 0
      %p385 = por %p383, %p384
      %p386 = scmp.ne.s32.totalorder %s378, %s380
      %p387 = scmp.eq.s32.totalorder %s36, 1
      %p388 = por %p386, %p387
      %p389 = scmp.ne.s32.totalorder %s380, %s381
      %p390 = scmp.eq.s32.totalorder %s36, 0
      %p391 = por %p389, %p390
      %p392 = scmp.ne.s32.totalorder %s380, %s381
      %p393 = scmp.eq.s32.totalorder %s37, 1
      %p394 = por %p392, %p393
      %p396 = scmp.ne.s32.totalorder %s381, %s395
      %p397 = scmp.eq.s32.totalorder %s37, 0
      %p398 = por %p396, %p397
      %s399 = ssub.s32 %s38, %s50
      %s400 = ssub.s32 %s39, %s46
      %s401 = sor.u32 %s399, %s400
      %p402 = scmp.eq.s32.totalorder %s401, 0
      %s404 = sadd.s32 %s403, 1
      %s405 = scalar_select %p402, %s403, %s404
      %p408 = pneg %p402
      %p409 = scmp.eq.s32.totalorder %s31, 1
      %p410 = por %p408, %p409
      %p411 = scmp.ne.s32.totalorder %s403, %s406
      %p412 = scmp.eq.s32.totalorder %s31, 0
      %p413 = por %p411, %p412
      %p414 = scmp.ne.s32.totalorder %s403, %s406
      %p415 = scmp.eq.s32.totalorder %s36, 1
      %p416 = por %p414, %p415
      %p417 = scmp.ne.s32.totalorder %s406, %s407
      %p418 = scmp.eq.s32.totalorder %s36, 0
      %p419 = por %p417, %p418
      %p420 = scmp.ne.s32.totalorder %s406, %s407
      %p421 = scmp.eq.s32.totalorder %s37, 1
      %p422 = por %p420, %p421
      %p424 = scmp.ne.s32.totalorder %s407, %s423
      %p425 = scmp.eq.s32.totalorder %s37, 0
      %p426 = por %p424, %p425
      %p427 = scmp.le.s32.totalorder 1, %s31
      %p428 = scmp.lt.s32.totalorder %s31, 3
      %p429 = pnand %p427, %p428
      %p430 = pneg %p429
      // Predicated region
      $region9: #{tpu_custom_call.1} parent=5 // pred_check
        _
      $region10: #{tpu_custom_call.1} parent=5 // pred_check_branch
        %432 = sbr.rel (%p429) target = $region12
      $region11: #{tpu_custom_call.1} parent=5 // pred_region
        %s433 = ssub.s32 %s31, 1
        // Predicated region
        $region13: #{tpu_custom_call.1} parent=11 // pred_check
          %p434 = pneg %p118
        $region14: #{tpu_custom_call.1} parent=11 // pred_check_branch
          %436 = sbr.rel (%p434) target = $region16
        $region15: #{tpu_custom_call.1} parent=11 // pred_region
          _
        $region16: #{tpu_custom_call.1} parent=11 // pred_fallthru
          _
        // Predicated region
        $region17: #{tpu_custom_call.1} parent=11 // pred_check
          %p437 = pneg %p139
        $region18: #{tpu_custom_call.1} parent=11 // pred_check_branch
          %439 = sbr.rel (%p437) target = $region20
        $region19: #{tpu_custom_call.1} parent=11 // pred_region
          _
        $region20: #{tpu_custom_call.1} parent=11 // pred_fallthru
          _
        // Predicated region
        $region21: #{tpu_custom_call.1} parent=11 // pred_check
          %p440 = pneg %p160
        $region22: #{tpu_custom_call.1} parent=11 // pred_check_branch
          %442 = sbr.rel (%p440) target = $region24
        $region23: #{tpu_custom_call.1} parent=11 // pred_region
          _
        $region24: #{tpu_custom_call.1} parent=11 // pred_fallthru
          _
        // Predicated region
        $region25: #{tpu_custom_call.1} parent=11 // pred_check
          %p443 = pneg %p181
        $region26: #{tpu_custom_call.1} parent=11 // pred_check_branch
          %445 = sbr.rel (%p443) target = $region28
        $region27: #{tpu_custom_call.1} parent=11 // pred_region
          _
        $region28: #{tpu_custom_call.1} parent=11 // pred_fallthru
          _
        // Predicated region
        $region29: #{tpu_custom_call.1} parent=11 // pred_check
          %p446 = pneg %p202
        $region30: #{tpu_custom_call.1} parent=11 // pred_check_branch
          %448 = sbr.rel (%p446) target = $region32
        $region31: #{tpu_custom_call.1} parent=11 // pred_region
          _
        $region32: #{tpu_custom_call.1} parent=11 // pred_fallthru
          _
        // Predicated region
        $region33: #{tpu_custom_call.1} parent=11 // pred_check
          %p449 = pneg %p223
        $region34: #{tpu_custom_call.1} parent=11 // pred_check_branch
          %451 = sbr.rel (%p449) target = $region36
        $region35: #{tpu_custom_call.1} parent=11 // pred_region
          _
        $region36: #{tpu_custom_call.1} parent=11 // pred_fallthru
          _
        // Predicated region
        $region37: #{tpu_custom_call.1} parent=11 // pred_check
          %p452 = pneg %p244
        $region38: #{tpu_custom_call.1} parent=11 // pred_check_branch
          %454 = sbr.rel (%p452) target = $region40
        $region39: #{tpu_custom_call.1} parent=11 // pred_region
          %s456 = ssub.s32 512, 512
          %457 = vsyncadd [#allocation6], %s456
          %s458 = sshll.u32 [#allocation7], 4
          %s459 = int_to_ptr.vmem [resolvable:$true] %s458
          %464 = dma.hbm_to_vmem [thread:$0]  %s8, 512, %s459, [#allocation6], 128, 128, 8
        $region40: #{tpu_custom_call.1} parent=11 // pred_fallthru
          _
        // Predicated region
        $region41: #{tpu_custom_call.1} parent=11 // pred_check
          %p465 = pneg %p265
        $region42: #{tpu_custom_call.1} parent=11 // pred_check_branch
          %467 = sbr.rel (%p465) target = $region44
        $region43: #{tpu_custom_call.1} parent=11 // pred_region
          _
        $region44: #{tpu_custom_call.1} parent=11 // pred_fallthru
          _
        // Predicated region
        $region45: #{tpu_custom_call.1} parent=11 // pred_check
          %p468 = pneg %p286
        $region46: #{tpu_custom_call.1} parent=11 // pred_check_branch
          %470 = sbr.rel (%p468) target = $region48
        $region47: #{tpu_custom_call.1} parent=11 // pred_region
          _
        $region48: #{tpu_custom_call.1} parent=11 // pred_fallthru
          _
        // Predicated region
        $region49: #{tpu_custom_call.1} parent=11 // pred_check
          %p471 = pneg %p307
        $region50: #{tpu_custom_call.1} parent=11 // pred_check_branch
          %473 = sbr.rel (%p471) target = $region52
        $region51: #{tpu_custom_call.1} parent=11 // pred_region
          _
        $region52: #{tpu_custom_call.1} parent=11 // pred_fallthru
          _
        // Predicated region
        $region53: #{tpu_custom_call.1} parent=11 // pred_check
          %p474 = pneg %p328
        $region54: #{tpu_custom_call.1} parent=11 // pred_check_branch
          %476 = sbr.rel (%p474) target = $region56
        $region55: #{tpu_custom_call.1} parent=11 // pred_region
          _
        $region56: #{tpu_custom_call.1} parent=11 // pred_fallthru
          _
        // Predicated region
        $region57: #{tpu_custom_call.1} parent=11 // pred_check
          %p477 = pneg %p349
        $region58: #{tpu_custom_call.1} parent=11 // pred_check_branch
          %479 = sbr.rel (%p477) target = $region60
        $region59: #{tpu_custom_call.1} parent=11 // pred_region
          _
        $region60: #{tpu_custom_call.1} parent=11 // pred_fallthru
          _
        // Predicated region
        $region61: #{tpu_custom_call.1} parent=11 // pred_check
          %p480 = pneg %p370
        $region62: #{tpu_custom_call.1} parent=11 // pred_check_branch
          %482 = sbr.rel (%p480) target = $region64
        $region63: #{tpu_custom_call.1} parent=11 // pred_region
          _
        $region64: #{tpu_custom_call.1} parent=11 // pred_fallthru
          _
        // Predicated region
        $region65: #{tpu_custom_call.1} parent=11 // pred_check
          %p483 = pneg %p391
        $region66: #{tpu_custom_call.1} parent=11 // pred_check_branch
          %485 = sbr.rel (%p483) target = $region68
        $region67: #{tpu_custom_call.1} parent=11 // pred_region
          _
        $region68: #{tpu_custom_call.1} parent=11 // pred_fallthru
          _
      $region12: #{tpu_custom_call.1} parent=5 // pred_fallthru
        _
      %p486 = scmp.lt.s32.totalorder %s31, 2
      // Predicated region
      $region69: #{tpu_custom_call.1} parent=5 // pred_check
        %p487 = pneg %p486
      $region70: #{tpu_custom_call.1} parent=5 // pred_check_branch
        %489 = sbr.rel (%p487) target = $region72
      $region71: #{tpu_custom_call.1} parent=5 // pred_region
        // Predicated region
        $region73: #{tpu_custom_call.1} parent=71 // pred_check
          %p490 = pneg %p65
        $region74: #{tpu_custom_call.1} parent=71 // pred_check_branch
          %492 = sbr.rel (%p490) target = $region76
        $region75: #{tpu_custom_call.1} parent=71 // pred_region
          %s493 = sand.u32 %s55, 1
          %s494 = scalar_lea.sflag [#allocation3], %s493
          %s495 = sand.u32 %s55, 1
          %s496 = smul.addr %s495, 8
          %s497 = scalar_lea.vmem [#allocation2], %s496
          %s499 = ssub.s32 128, 128
          %500 = vsyncadd %s494, %s499
          %s501 = sadd.s32 %s39, %s38
          %s502 = smul.addr %s501, 128
          %s503 = scalar_lea.hbm %s0, %s502
          %s505 = sshll.u32 %s497, 4
          %s506 = int_to_ptr.vmem [resolvable:$true] %s505
          %508 = dma.hbm_to_vmem [thread:$0]  %s503, 128, %s506, %s494
        $region76: #{tpu_custom_call.1} parent=71 // pred_fallthru
          _
        // Predicated region
        $region77: #{tpu_custom_call.1} parent=71 // pred_check
          %p509 = pneg %p91
        $region78: #{tpu_custom_call.1} parent=71 // pred_check_branch
          %511 = sbr.rel (%p509) target = $region80
        $region79: #{tpu_custom_call.1} parent=71 // pred_region
          %s512 = sand.u32 %s31, 1
          %s513 = scalar_lea.sflag [#allocation6], %s512
          %s514 = sand.u32 %s81, 1
          %s515 = smul.addr %s514, 8
          %s516 = scalar_lea.vmem [#allocation5], %s515
          %s518 = ssub.s32 128, 128
          %519 = vsyncadd %s513, %s518
          %s520 = smul.addr %s38, 128
          %s521 = scalar_lea.hbm %s1, %s520
          %s523 = sshll.u32 %s516, 4
          %s524 = int_to_ptr.vmem [resolvable:$true] %s523
          %526 = dma.hbm_to_vmem [thread:$0]  %s521, 128, %s524, %s513
        $region80: #{tpu_custom_call.1} parent=71 // pred_fallthru
          _
      $region72: #{tpu_custom_call.1} parent=5 // pred_fallthru
        _
      %p527 = scmp.le.s32.totalorder 1, %s31
      %p528 = scmp.lt.s32.totalorder %s31, 3
      %p529 = pnand %p527, %p528
      %p530 = pneg %p529
      // Predicated region
      $region81: #{tpu_custom_call.1} parent=5 // pred_check
        _
      $region82: #{tpu_custom_call.1} parent=5 // pred_check_branch
        %532 = sbr.rel (%p529) target = $region84
      $region83: #{tpu_custom_call.1} parent=5 // pred_region
        %s533 = ssub.s32 %s31, 1
        %s534 = sand.u32 %s58, 1
        %s535 = scalar_lea.sflag [#allocation3], %s534
        %s536 = sand.u32 %s58, 1
        %s537 = smul.addr %s536, 8
        %s538 = scalar_lea.vmem [#allocation2], %s537
        // Predicated region
        $region85: #{tpu_custom_call.1} parent=83 // pred_check
          %p539 = pneg %p71
        $region86: #{tpu_custom_call.1} parent=83 // pred_check_branch
          %541 = sbr.rel (%p539) target = $region88
        $region87: #{tpu_custom_call.1} parent=83 // pred_region
          %542 = dma.done %s535, 128
        $region88: #{tpu_custom_call.1} parent=83 // pred_fallthru
          _
        %s543 = sand.u32 %s36, 1
        %s544 = scalar_lea.sflag [#allocation6], %s543
        %s545 = sand.u32 %s84, 1
        %s546 = smul.addr %s545, 8
        %s547 = scalar_lea.vmem [#allocation5], %s546
        // Predicated region
        $region89: #{tpu_custom_call.1} parent=83 // pred_check
          %p548 = pneg %p97
        $region90: #{tpu_custom_call.1} parent=83 // pred_check_branch
          %550 = sbr.rel (%p548) target = $region92
        $region91: #{tpu_custom_call.1} parent=83 // pred_region
          %551 = dma.done %s544, 128
        $region92: #{tpu_custom_call.1} parent=83 // pred_fallthru
          _
        // Predicated region
        $region93: #{tpu_custom_call.1} parent=83 // pred_check
          %p552 = pneg %p244
        $region94: #{tpu_custom_call.1} parent=83 // pred_check_branch
          %554 = sbr.rel (%p552) target = $region96
        $region95: #{tpu_custom_call.1} parent=83 // pred_region
          %555 = dma.done [#allocation6], 512
        $region96: #{tpu_custom_call.1} parent=83 // pred_fallthru
          _
        %s556 = sand.u32 %s58, 1
        %s557 = scalar_lea.sflag [#allocation3], %s556
        %s558 = sand.u32 %s58, 1
        %s559 = smul.addr %s558, 8
        %s560 = scalar_lea.vmem [#allocation2], %s559
        %p561 = pneg %p71
        %p562 = pneg %p68
        %s563 = sand.u32 %s36, 1
        %s564 = scalar_lea.sflag [#allocation6], %s563
        %s565 = sand.u32 %s84, 1
        %s566 = smul.addr %s565, 8
        %s567 = scalar_lea.vmem [#allocation5], %s566
        %p568 = pneg %p97
        %p569 = pneg %p94
        %p570 = pneg %p118
        %p571 = pneg %p115
        %p572 = pneg %p139
        %p573 = pneg %p136
        %p574 = pneg %p160
        %p575 = pneg %p157
        %p576 = pneg %p181
        %p577 = pneg %p178
        %p578 = pneg %p202
        %p579 = pneg %p199
        %p580 = pneg %p223
        %p581 = pneg %p220
        %p582 = pneg %p244
        %p583 = pneg %p241
        %p584 = pneg %p265
        %p585 = pneg %p262
        %p586 = pneg %p286
        %p587 = pneg %p283
        %p588 = pneg %p307
        %p589 = pneg %p304
        %p590 = pneg %p328
        %p591 = pneg %p325
        %p592 = pneg %p349
        %p593 = pneg %p346
        %p594 = pneg %p370
        %p595 = pneg %p367
        %p596 = pneg %p391
        %p597 = pneg %p388
        %p598 = pneg %p419
        %p599 = pneg %p416
        %s600 = sand.u32 %s406, 1
        %s601 = scalar_lea.sflag [#allocation4], %s600
        %s602 = sand.u32 %s406, 1
        %s603 = smul.addr %s602, 8
        %s604 = scalar_lea.vmem [#allocation8], %s603
        %v605 = vld [vmem:[%s538] sm:$0xff]
        %v606 = vld [vmem:[%s547] sm:$0xff]
        %v607 = vld [vmem:[%s2] sm:$0xff]
        %v608 = vld [vmem:[%s2 + $0x8] sm:$0xff]
        %v609 = vld [vmem:[%s2 + $0x10] sm:$0xff]
        %v610 = vld [vmem:[%s2 + $0x18] sm:$0xff]
        %v611 = vld [vmem:[%s3] sm:$0x1]
        %v613 = vlaneseq
        %v614 = vshrl.u32 %v613, 7
        %v615 = vsub.s32 0, %v614
        %v616 = vrot.slane %v611, %v615
        %vm618 = vcmask 261120
        %v620 = vsel %vm618, %v605, 0
        %622 = vmatprep.subr.mxu0 0.0
        %623 = vmatpush1.msra.mxu0 0.0
        %624 = vmatprep.subr.mxu0 0.0
        %625 = vmatpush1.msra.mxu0 0.0
        %626 = vmatprep.subr.mxu0 0.0
        %627 = vmatpush1.msra.mxu0 0.0
        %628 = vmatprep.subr.mxu0 0.0
        %629 = vmatpush1.msra.mxu0 0.0
        %630 = vmatprep.subr.mxu0 0.0
        %631 = vmatpush1.msra.mxu0 0.0
        %632 = vmatprep.subr.mxu0 0.0
        %633 = vmatpush1.msra.mxu0 0.0
        %634 = vmatprep.subr.mxu0 0.0
        %635 = vmatpush1.msra.mxu0 0.0
        %636 = vmatprep.subr.mxu0 0.0
        %637 = vmatpush1.msra.mxu0 0.0
        %638 = vmatprep.subr.mxu0 0.0
        %639 = vmatpush1.msra.mxu0 0.0
        %640 = vmatprep.subr.mxu0 0.0
        %641 = vmatpush1.msra.mxu0 0.0
        %642 = vmatprep.subr.mxu0 0.0
        %643 = vmatpush1.msra.mxu0 0.0
        %644 = vmatprep.subr.mxu0 0.0
        %645 = vmatpush1.msra.mxu0 0.0
        %646 = vmatprep.subr.mxu0 0.0
        %647 = vmatpush1.msra.mxu0 %v610
        %648 = vmatprep.subr.mxu0 0.0
        %649 = vmatpush1.msra.mxu0 %v609
        %650 = vmatprep.subr.mxu0 0.0
        %651 = vmatpush1.msra.mxu0 %v608
        %652 = vmatprep.subr.mxu0 0.0
        %653 = vmatpush1.msra.mxu0 %v607
        %654 = vmatprep.subr.mxu0 0.0
        %655 = vmatpush2.msra.mxu0 0.0
        %656 = vmatprep.subr.mxu0 0.0
        %657 = vmatpush2.msra.mxu0 0.0
        %658 = vmatprep.subr.mxu0 0.0
        %659 = vmatpush2.msra.mxu0 0.0
        %660 = vmatprep.subr.mxu0 0.0
        %661 = vmatpush2.msra.mxu0 0.0
        %662 = vmatprep.subr.mxu0 0.0
        %663 = vmatpush2.msra.mxu0 0.0
        %664 = vmatprep.subr.mxu0 0.0
        %665 = vmatpush2.msra.mxu0 0.0
        %666 = vmatprep.subr.mxu0 0.0
        %667 = vmatpush2.msra.mxu0 0.0
        %668 = vmatprep.subr.mxu0 0.0
        %669 = vmatpush2.msra.mxu0 0.0
        %670 = vmatprep.subr.mxu0 0.0
        %671 = vmatpush2.msra.mxu0 0.0
        %672 = vmatprep.subr.mxu0 0.0
        %673 = vmatpush2.msra.mxu0 0.0
        %674 = vmatprep.subr.mxu0 0.0
        %675 = vmatpush2.msra.mxu0 0.0
        %676 = vmatprep.subr.mxu0 0.0
        %677 = vmatpush2.msra.mxu0 0.0
        %678 = vmatprep.subr.mxu0 0.0
        %679 = vmatpush2.msra.mxu0 0.0
        %680 = vmatprep.subr.mxu0 0.0
        %681 = vmatpush2.msra.mxu0 0.0
        %682 = vmatprep.subr.mxu0 0.0
        %683 = vmatpush2.msra.mxu0 0.0
        %684 = vmatprep.subr.mxu0 0.0
        %685 = vmatpush2.msra.mxu0 0.0
        %686 = vmatprep.mubr.f32.mxu0 0.0
        %687 = vmatmul.mubr.f32.gmra.mxu0 %v620
        %v688 = vpop.f32.mrf.mxu0
        %v689 = vadd.f32 %v616, %v688
        %v690 = vpop.f32.mrf.mxu0
        %691 = vdwg.mxu0
        %v692 = vmul.f32 %v689, 0.35355338
        %v693 = vld [vmem:[%s4] sm:$0xff]
        %v694 = vld [vmem:[%s4 + $0x8] sm:$0xff]
        %v695 = vld [vmem:[%s4 + $0x10] sm:$0xff]
        %v696 = vld [vmem:[%s4 + $0x18] sm:$0xff]
        %v697 = vld [vmem:[%s5] sm:$0x1]
        %v699 = vlaneseq
        %v700 = vshrl.u32 %v699, 7
        %v701 = vsub.s32 0, %v700
        %v702 = vrot.slane %v697, %v701
        %v705 = vsel %vm618, %v606, 0
        %707 = vmatprep.subr.mxu0 0.0
        %708 = vmatpush1.msra.mxu0 0.0
        %709 = vmatprep.subr.mxu0 0.0
        %710 = vmatpush1.msra.mxu0 0.0
        %711 = vmatprep.subr.mxu0 0.0
        %712 = vmatpush1.msra.mxu0 0.0
        %713 = vmatprep.subr.mxu0 0.0
        %714 = vmatpush1.msra.mxu0 0.0
        %715 = vmatprep.subr.mxu0 0.0
        %716 = vmatpush1.msra.mxu0 0.0
        %717 = vmatprep.subr.mxu0 0.0
        %718 = vmatpush1.msra.mxu0 0.0
        %719 = vmatprep.subr.mxu0 0.0
        %720 = vmatpush1.msra.mxu0 0.0
        %721 = vmatprep.subr.mxu0 0.0
        %722 = vmatpush1.msra.mxu0 0.0
        %723 = vmatprep.subr.mxu0 0.0
        %724 = vmatpush1.msra.mxu0 0.0
        %725 = vmatprep.subr.mxu0 0.0
        %726 = vmatpush1.msra.mxu0 0.0
        %727 = vmatprep.subr.mxu0 0.0
        %728 = vmatpush1.msra.mxu0 0.0
        %729 = vmatprep.subr.mxu0 0.0
        %730 = vmatpush1.msra.mxu0 0.0
        %731 = vmatprep.subr.mxu0 0.0
        %732 = vmatpush1.msra.mxu0 %v696
        %733 = vmatprep.subr.mxu0 0.0
        %734 = vmatpush1.msra.mxu0 %v695
        %735 = vmatprep.subr.mxu0 0.0
        %736 = vmatpush1.msra.mxu0 %v694
        %737 = vmatprep.subr.mxu0 0.0
        %738 = vmatpush1.msra.mxu0 %v693
        %739 = vmatprep.subr.mxu0 0.0
        %740 = vmatpush2.msra.mxu0 0.0
        %741 = vmatprep.subr.mxu0 0.0
        %742 = vmatpush2.msra.mxu0 0.0
        %743 = vmatprep.subr.mxu0 0.0
        %744 = vmatpush2.msra.mxu0 0.0
        %745 = vmatprep.subr.mxu0 0.0
        %746 = vmatpush2.msra.mxu0 0.0
        %747 = vmatprep.subr.mxu0 0.0
        %748 = vmatpush2.msra.mxu0 0.0
        %749 = vmatprep.subr.mxu0 0.0
        %750 = vmatpush2.msra.mxu0 0.0
        %751 = vmatprep.subr.mxu0 0.0
        %752 = vmatpush2.msra.mxu0 0.0
        %753 = vmatprep.subr.mxu0 0.0
        %754 = vmatpush2.msra.mxu0 0.0
        %755 = vmatprep.subr.mxu0 0.0
        %756 = vmatpush2.msra.mxu0 0.0
        %757 = vmatprep.subr.mxu0 0.0
        %758 = vmatpush2.msra.mxu0 0.0
        %759 = vmatprep.subr.mxu0 0.0
        %760 = vmatpush2.msra.mxu0 0.0
        %761 = vmatprep.subr.mxu0 0.0
        %762 = vmatpush2.msra.mxu0 0.0
        %763 = vmatprep.subr.mxu0 0.0
        %764 = vmatpush2.msra.mxu0 0.0
        %765 = vmatprep.subr.mxu0 0.0
        %766 = vmatpush2.msra.mxu0 0.0
        %767 = vmatprep.subr.mxu0 0.0
        %768 = vmatpush2.msra.mxu0 0.0
        %769 = vmatprep.subr.mxu0 0.0
        %770 = vmatpush2.msra.mxu0 0.0
        %771 = vmatprep.mubr.f32.mxu0 0.0
        %772 = vmatmul.mubr.f32.gmra.mxu0 %v705
        %v773 = vpop.f32.mrf.mxu0
        %v774 = vadd.f32 %v702, %v773
        %v775 = vpop.f32.mrf.mxu0
        %776 = vdwg.mxu0
        %vm777 = vcmask 64512
        %v779 = vsel %vm777, %v692, 0
        %v782 = vsel %vm777, %v774, 0
        %784 = vmatprep.subr.mxu0 0.0
        %785 = vmatpush1.xpose.msra.mxu0 0.0
        %786 = vmatprep.subr.mxu0 0.0
        %787 = vmatpush1.xpose.msra.mxu0 0.0
        %788 = vmatprep.subr.mxu0 0.0
        %789 = vmatpush1.xpose.msra.mxu0 0.0
        %790 = vmatprep.subr.mxu0 0.0
        %791 = vmatpush1.xpose.msra.mxu0 0.0
        %792 = vmatprep.subr.mxu0 0.0
        %793 = vmatpush1.xpose.msra.mxu0 0.0
        %794 = vmatprep.subr.mxu0 0.0
        %795 = vmatpush1.xpose.msra.mxu0 0.0
        %796 = vmatprep.subr.mxu0 0.0
        %797 = vmatpush1.xpose.msra.mxu0 0.0
        %798 = vmatprep.subr.mxu0 0.0
        %799 = vmatpush1.xpose.msra.mxu0 0.0
        %800 = vmatprep.subr.mxu0 0.0
        %801 = vmatpush1.xpose.msra.mxu0 0.0
        %802 = vmatprep.subr.mxu0 0.0
        %803 = vmatpush1.xpose.msra.mxu0 0.0
        %804 = vmatprep.subr.mxu0 0.0
        %805 = vmatpush1.xpose.msra.mxu0 0.0
        %806 = vmatprep.subr.mxu0 0.0
        %807 = vmatpush1.xpose.msra.mxu0 0.0
        %808 = vmatprep.subr.mxu0 0.0
        %809 = vmatpush1.xpose.msra.mxu0 0.0
        %810 = vmatprep.subr.mxu0 0.0
        %811 = vmatpush1.xpose.msra.mxu0 0.0
        %812 = vmatprep.subr.mxu0 0.0
        %813 = vmatpush1.xpose.msra.mxu0 0.0
        %814 = vmatprep.subr.mxu0 0.0
        %815 = vmatpush1.xpose.msra.mxu0 %v782
        %816 = vmatprep.subr.mxu0 0.0
        %817 = vmatpush2.xpose.msra.mxu0 0.0
        %818 = vmatprep.subr.mxu0 0.0
        %819 = vmatpush2.xpose.msra.mxu0 0.0
        %820 = vmatprep.subr.mxu0 0.0
        %821 = vmatpush2.xpose.msra.mxu0 0.0
        %822 = vmatprep.subr.mxu0 0.0
        %823 = vmatpush2.xpose.msra.mxu0 0.0
        %824 = vmatprep.subr.mxu0 0.0
        %825 = vmatpush2.xpose.msra.mxu0 0.0
        %826 = vmatprep.subr.mxu0 0.0
        %827 = vmatpush2.xpose.msra.mxu0 0.0
        %828 = vmatprep.subr.mxu0 0.0
        %829 = vmatpush2.xpose.msra.mxu0 0.0
        %830 = vmatprep.subr.mxu0 0.0
        %831 = vmatpush2.xpose.msra.mxu0 0.0
        %832 = vmatprep.subr.mxu0 0.0
        %833 = vmatpush2.xpose.msra.mxu0 0.0
        %834 = vmatprep.subr.mxu0 0.0
        %835 = vmatpush2.xpose.msra.mxu0 0.0
        %836 = vmatprep.subr.mxu0 0.0
        %837 = vmatpush2.xpose.msra.mxu0 0.0
        %838 = vmatprep.subr.mxu0 0.0
        %839 = vmatpush2.xpose.msra.mxu0 0.0
        %840 = vmatprep.subr.mxu0 0.0
        %841 = vmatpush2.xpose.msra.mxu0 0.0
        %842 = vmatprep.subr.mxu0 0.0
        %843 = vmatpush2.xpose.msra.mxu0 0.0
        %844 = vmatprep.subr.mxu0 0.0
        %845 = vmatpush2.xpose.msra.mxu0 0.0
        %846 = vmatprep.subr.mxu0 0.0
        %847 = vmatpush2.xpose.msra.mxu0 0.0
        %848 = vmatprep.mubr.f32.mxu0 0.0
        %849 = vmatmul.mubr.f32.gmra.mxu0 %v779
        %v850 = vpop.f32.mrf.mxu0
        %v851 = vadd.f32 0.0, %v850
        %v852 = vpop.f32.mrf.mxu0
        %853 = vdwg.mxu0
        %v854 = vsel %vm777, %v851, -inf
        %855 = vmax.xlane.f32.xlu0 %v854
        %v856 = vpop.xlane.xlu0 %855
        %v857 = vsub.f32 %v851, %v856
        %v858 = vmul.f32 %v857, 1.442695
        %v859 = vpow.pop %v858
        %v860 = vsel %vm777, %v859, 0.0
        %861 = vadd.xlane.f32.xlu0 %v860
        %v862 = vpop.xlane.xlu0 %861
        %v863 = vrcp.pop %v862
        %v864 = vmul.f32 %v859, %v863
        %865 = vrot.lane.b32.xlu0 %v774, 96
        %v866 = vpop.permute.xlu0 %865
        %v869 = vsel %vm777, %v864, 0
        %871 = vmatprep.subr.mxu0 0.0
        %872 = vmatpush1.msra.mxu0 0.0
        %873 = vmatprep.subr.mxu0 0.0
        %874 = vmatpush1.msra.mxu0 0.0
        %875 = vmatprep.subr.mxu0 0.0
        %876 = vmatpush1.msra.mxu0 0.0
        %877 = vmatprep.subr.mxu0 0.0
        %878 = vmatpush1.msra.mxu0 0.0
        %879 = vmatprep.subr.mxu0 0.0
        %880 = vmatpush1.msra.mxu0 0.0
        %881 = vmatprep.subr.mxu0 0.0
        %882 = vmatpush1.msra.mxu0 0.0
        %883 = vmatprep.subr.mxu0 0.0
        %884 = vmatpush1.msra.mxu0 0.0
        %885 = vmatprep.subr.mxu0 0.0
        %886 = vmatpush1.msra.mxu0 0.0
        %887 = vmatprep.subr.mxu0 0.0
        %888 = vmatpush1.msra.mxu0 0.0
        %889 = vmatprep.subr.mxu0 0.0
        %890 = vmatpush1.msra.mxu0 0.0
        %891 = vmatprep.subr.mxu0 0.0
        %892 = vmatpush1.msra.mxu0 0.0
        %893 = vmatprep.subr.mxu0 0.0
        %894 = vmatpush1.msra.mxu0 0.0
        %895 = vmatprep.subr.mxu0 0.0
        %896 = vmatpush1.msra.mxu0 0.0
        %897 = vmatprep.subr.mxu0 0.0
        %898 = vmatpush1.msra.mxu0 0.0
        %899 = vmatprep.subr.mxu0 0.0
        %900 = vmatpush1.msra.mxu0 0.0
        %901 = vmatprep.subr.mxu0 0.0
        %902 = vmatpush1.msra.mxu0 %v866
        %903 = vmatprep.subr.mxu0 0.0
        %904 = vmatpush2.msra.mxu0 0.0
        %905 = vmatprep.subr.mxu0 0.0
        %906 = vmatpush2.msra.mxu0 0.0
        %907 = vmatprep.subr.mxu0 0.0
        %908 = vmatpush2.msra.mxu0 0.0
        %909 = vmatprep.subr.mxu0 0.0
        %910 = vmatpush2.msra.mxu0 0.0
        %911 = vmatprep.subr.mxu0 0.0
        %912 = vmatpush2.msra.mxu0 0.0
        %913 = vmatprep.subr.mxu0 0.0
        %914 = vmatpush2.msra.mxu0 0.0
        %915 = vmatprep.subr.mxu0 0.0
        %916 = vmatpush2.msra.mxu0 0.0
        %917 = vmatprep.subr.mxu0 0.0
        %918 = vmatpush2.msra.mxu0 0.0
        %919 = vmatprep.subr.mxu0 0.0
        %920 = vmatpush2.msra.mxu0 0.0
        %921 = vmatprep.subr.mxu0 0.0
        %922 = vmatpush2.msra.mxu0 0.0
        %923 = vmatprep.subr.mxu0 0.0
        %924 = vmatpush2.msra.mxu0 0.0
        %925 = vmatprep.subr.mxu0 0.0
        %926 = vmatpush2.msra.mxu0 0.0
        %927 = vmatprep.subr.mxu0 0.0
        %928 = vmatpush2.msra.mxu0 0.0
        %929 = vmatprep.subr.mxu0 0.0
        %930 = vmatpush2.msra.mxu0 0.0
        %931 = vmatprep.subr.mxu0 0.0
        %932 = vmatpush2.msra.mxu0 0.0
        %933 = vmatprep.subr.mxu0 0.0
        %934 = vmatpush2.msra.mxu0 0.0
        %935 = vmatprep.mubr.f32.mxu0 0.0
        %936 = vmatmul.mubr.f32.gmra.mxu0 %v869
        %v937 = vpop.f32.mrf.mxu0
        %v938 = vadd.f32 0.0, %v937
        %v939 = vpop.f32.mrf.mxu0
        %940 = vdwg.mxu0
        %941 = vrot.lane.b32.xlu0 %v692, 120
        %v942 = vpop.permute.xlu0 %941
        %943 = vrot.lane.b32.xlu0 %v774, 120
        %v944 = vpop.permute.xlu0 %943
        %v945 = vsel %vm777, %v942, 0
        %v947 = vsel %vm777, %v944, 0
        %949 = vmatprep.subr.mxu0 0.0
        %950 = vmatpush1.xpose.msra.mxu0 0.0
        %951 = vmatprep.subr.mxu0 0.0
        %952 = vmatpush1.xpose.msra.mxu0 0.0
        %953 = vmatprep.subr.mxu0 0.0
        %954 = vmatpush1.xpose.msra.mxu0 0.0
        %955 = vmatprep.subr.mxu0 0.0
        %956 = vmatpush1.xpose.msra.mxu0 0.0
        %957 = vmatprep.subr.mxu0 0.0
        %958 = vmatpush1.xpose.msra.mxu0 0.0
        %959 = vmatprep.subr.mxu0 0.0
        %960 = vmatpush1.xpose.msra.mxu0 0.0
        %961 = vmatprep.subr.mxu0 0.0
        %962 = vmatpush1.xpose.msra.mxu0 0.0
        %963 = vmatprep.subr.mxu0 0.0
        %964 = vmatpush1.xpose.msra.mxu0 0.0
        %965 = vmatprep.subr.mxu0 0.0
        %966 = vmatpush1.xpose.msra.mxu0 0.0
        %967 = vmatprep.subr.mxu0 0.0
        %968 = vmatpush1.xpose.msra.mxu0 0.0
        %969 = vmatprep.subr.mxu0 0.0
        %970 = vmatpush1.xpose.msra.mxu0 0.0
        %971 = vmatprep.subr.mxu0 0.0
        %972 = vmatpush1.xpose.msra.mxu0 0.0
        %973 = vmatprep.subr.mxu0 0.0
        %974 = vmatpush1.xpose.msra.mxu0 0.0
        %975 = vmatprep.subr.mxu0 0.0
        %976 = vmatpush1.xpose.msra.mxu0 0.0
        %977 = vmatprep.subr.mxu0 0.0
        %978 = vmatpush1.xpose.msra.mxu0 0.0
        %979 = vmatprep.subr.mxu0 0.0
        %980 = vmatpush1.xpose.msra.mxu0 %v947
        %981 = vmatprep.subr.mxu0 0.0
        %982 = vmatpush2.xpose.msra.mxu0 0.0
        %983 = vmatprep.subr.mxu0 0.0
        %984 = vmatpush2.xpose.msra.mxu0 0.0
        %985 = vmatprep.subr.mxu0 0.0
        %986 = vmatpush2.xpose.msra.mxu0 0.0
        %987 = vmatprep.subr.mxu0 0.0
        %988 = vmatpush2.xpose.msra.mxu0 0.0
        %989 = vmatprep.subr.mxu0 0.0
        %990 = vmatpush2.xpose.msra.mxu0 0.0
        %991 = vmatprep.subr.mxu0 0.0
        %992 = vmatpush2.xpose.msra.mxu0 0.0
        %993 = vmatprep.subr.mxu0 0.0
        %994 = vmatpush2.xpose.msra.mxu0 0.0
        %995 = vmatprep.subr.mxu0 0.0
        %996 = vmatpush2.xpose.msra.mxu0 0.0
        %997 = vmatprep.subr.mxu0 0.0
        %998 = vmatpush2.xpose.msra.mxu0 0.0
        %999 = vmatprep.subr.mxu0 0.0
        %1000 = vmatpush2.xpose.msra.mxu0 0.0
        %1001 = vmatprep.subr.mxu0 0.0
        %1002 = vmatpush2.xpose.msra.mxu0 0.0
        %1003 = vmatprep.subr.mxu0 0.0
        %1004 = vmatpush2.xpose.msra.mxu0 0.0
        %1005 = vmatprep.subr.mxu0 0.0
        %1006 = vmatpush2.xpose.msra.mxu0 0.0
        %1007 = vmatprep.subr.mxu0 0.0
        %1008 = vmatpush2.xpose.msra.mxu0 0.0
        %1009 = vmatprep.subr.mxu0 0.0
        %1010 = vmatpush2.xpose.msra.mxu0 0.0
        %1011 = vmatprep.subr.mxu0 0.0
        %1012 = vmatpush2.xpose.msra.mxu0 0.0
        %1013 = vmatprep.mubr.f32.mxu0 0.0
        %1014 = vmatmul.mubr.f32.gmra.mxu0 %v945
        %v1015 = vpop.f32.mrf.mxu0
        %v1016 = vadd.f32 0.0, %v1015
        %v1017 = vpop.f32.mrf.mxu0
        %1018 = vdwg.mxu0
        %v1019 = vsel %vm777, %v1016, -inf
        %1020 = vmax.xlane.f32.xlu0 %v1019
        %v1021 = vpop.xlane.xlu0 %1020
        %v1022 = vsub.f32 %v1016, %v1021
        %v1023 = vmul.f32 %v1022, 1.442695
        %v1024 = vpow.pop %v1023
        %v1025 = vsel %vm777, %v1024, 0.0
        %1026 = vadd.xlane.f32.xlu0 %v1025
        %v1027 = vpop.xlane.xlu0 %1026
        %v1028 = vrcp.pop %v1027
        %v1029 = vmul.f32 %v1024, %v1028
        %1030 = vrot.lane.b32.xlu0 %v774, 88
        %v1031 = vpop.permute.xlu0 %1030
        %v1034 = vsel %vm777, %v1029, 0
        %1036 = vmatprep.subr.mxu0 0.0
        %1037 = vmatpush1.msra.mxu0 0.0
        %1038 = vmatprep.subr.mxu0 0.0
        %1039 = vmatpush1.msra.mxu0 0.0
        %1040 = vmatprep.subr.mxu0 0.0
        %1041 = vmatpush1.msra.mxu0 0.0
        %1042 = vmatprep.subr.mxu0 0.0
        %1043 = vmatpush1.msra.mxu0 0.0
        %1044 = vmatprep.subr.mxu0 0.0
        %1045 = vmatpush1.msra.mxu0 0.0
        %1046 = vmatprep.subr.mxu0 0.0
        %1047 = vmatpush1.msra.mxu0 0.0
        %1048 = vmatprep.subr.mxu0 0.0
        %1049 = vmatpush1.msra.mxu0 0.0
        %1050 = vmatprep.subr.mxu0 0.0
        %1051 = vmatpush1.msra.mxu0 0.0
        %1052 = vmatprep.subr.mxu0 0.0
        %1053 = vmatpush1.msra.mxu0 0.0
        %1054 = vmatprep.subr.mxu0 0.0
        %1055 = vmatpush1.msra.mxu0 0.0
        %1056 = vmatprep.subr.mxu0 0.0
        %1057 = vmatpush1.msra.mxu0 0.0
        %1058 = vmatprep.subr.mxu0 0.0
        %1059 = vmatpush1.msra.mxu0 0.0
        %1060 = vmatprep.subr.mxu0 0.0
        %1061 = vmatpush1.msra.mxu0 0.0
        %1062 = vmatprep.subr.mxu0 0.0
        %1063 = vmatpush1.msra.mxu0 0.0
        %1064 = vmatprep.subr.mxu0 0.0
        %1065 = vmatpush1.msra.mxu0 0.0
        %1066 = vmatprep.subr.mxu0 0.0
        %1067 = vmatpush1.msra.mxu0 %v1031
        %1068 = vmatprep.subr.mxu0 0.0
        %1069 = vmatpush2.msra.mxu0 0.0
        %1070 = vmatprep.subr.mxu0 0.0
        %1071 = vmatpush2.msra.mxu0 0.0
        %1072 = vmatprep.subr.mxu0 0.0
        %1073 = vmatpush2.msra.mxu0 0.0
        %1074 = vmatprep.subr.mxu0 0.0
        %1075 = vmatpush2.msra.mxu0 0.0
        %1076 = vmatprep.subr.mxu0 0.0
        %1077 = vmatpush2.msra.mxu0 0.0
        %1078 = vmatprep.subr.mxu0 0.0
        %1079 = vmatpush2.msra.mxu0 0.0
        %1080 = vmatprep.subr.mxu0 0.0
        %1081 = vmatpush2.msra.mxu0 0.0
        %1082 = vmatprep.subr.mxu0 0.0
        %1083 = vmatpush2.msra.mxu0 0.0
        %1084 = vmatprep.subr.mxu0 0.0
        %1085 = vmatpush2.msra.mxu0 0.0
        %1086 = vmatprep.subr.mxu0 0.0
        %1087 = vmatpush2.msra.mxu0 0.0
        %1088 = vmatprep.subr.mxu0 0.0
        %1089 = vmatpush2.msra.mxu0 0.0
        %1090 = vmatprep.subr.mxu0 0.0
        %1091 = vmatpush2.msra.mxu0 0.0
        %1092 = vmatprep.subr.mxu0 0.0
        %1093 = vmatpush2.msra.mxu0 0.0
        %1094 = vmatprep.subr.mxu0 0.0
        %1095 = vmatpush2.msra.mxu0 0.0
        %1096 = vmatprep.subr.mxu0 0.0
        %1097 = vmatpush2.msra.mxu0 0.0
        %1098 = vmatprep.subr.mxu0 0.0
        %1099 = vmatpush2.msra.mxu0 0.0
        %1100 = vmatprep.mubr.f32.mxu0 0.0
        %1101 = vmatmul.mubr.f32.gmra.mxu0 %v1034
        %v1102 = vpop.f32.mrf.mxu0
        %v1103 = vadd.f32 0.0, %v1102
        %v1104 = vpop.f32.mrf.mxu0
        %1105 = vdwg.mxu0
        %1106 = vrot.lane.b32.xlu0 %v692, 112
        %v1107 = vpop.permute.xlu0 %1106
        %1108 = vrot.lane.b32.xlu0 %v774, 112
        %v1109 = vpop.permute.xlu0 %1108
        %v1110 = vsel %vm777, %v1107, 0
        %v1112 = vsel %vm777, %v1109, 0
        %1114 = vmatprep.subr.mxu0 0.0
        %1115 = vmatpush1.xpose.msra.mxu0 0.0
        %1116 = vmatprep.subr.mxu0 0.0
        %1117 = vmatpush1.xpose.msra.mxu0 0.0
        %1118 = vmatprep.subr.mxu0 0.0
        %1119 = vmatpush1.xpose.msra.mxu0 0.0
        %1120 = vmatprep.subr.mxu0 0.0
        %1121 = vmatpush1.xpose.msra.mxu0 0.0
        %1122 = vmatprep.subr.mxu0 0.0
        %1123 = vmatpush1.xpose.msra.mxu0 0.0
        %1124 = vmatprep.subr.mxu0 0.0
        %1125 = vmatpush1.xpose.msra.mxu0 0.0
        %1126 = vmatprep.subr.mxu0 0.0
        %1127 = vmatpush1.xpose.msra.mxu0 0.0
        %1128 = vmatprep.subr.mxu0 0.0
        %1129 = vmatpush1.xpose.msra.mxu0 0.0
        %1130 = vmatprep.subr.mxu0 0.0
        %1131 = vmatpush1.xpose.msra.mxu0 0.0
        %1132 = vmatprep.subr.mxu0 0.0
        %1133 = vmatpush1.xpose.msra.mxu0 0.0
        %1134 = vmatprep.subr.mxu0 0.0
        %1135 = vmatpush1.xpose.msra.mxu0 0.0
        %1136 = vmatprep.subr.mxu0 0.0
        %1137 = vmatpush1.xpose.msra.mxu0 0.0
        %1138 = vmatprep.subr.mxu0 0.0
        %1139 = vmatpush1.xpose.msra.mxu0 0.0
        %1140 = vmatprep.subr.mxu0 0.0
        %1141 = vmatpush1.xpose.msra.mxu0 0.0
        %1142 = vmatprep.subr.mxu0 0.0
        %1143 = vmatpush1.xpose.msra.mxu0 0.0
        %1144 = vmatprep.subr.mxu0 0.0
        %1145 = vmatpush1.xpose.msra.mxu0 %v1112
        %1146 = vmatprep.subr.mxu0 0.0
        %1147 = vmatpush2.xpose.msra.mxu0 0.0
        %1148 = vmatprep.subr.mxu0 0.0
        %1149 = vmatpush2.xpose.msra.mxu0 0.0
        %1150 = vmatprep.subr.mxu0 0.0
        %1151 = vmatpush2.xpose.msra.mxu0 0.0
        %1152 = vmatprep.subr.mxu0 0.0
        %1153 = vmatpush2.xpose.msra.mxu0 0.0
        %1154 = vmatprep.subr.mxu0 0.0
        %1155 = vmatpush2.xpose.msra.mxu0 0.0
        %1156 = vmatprep.subr.mxu0 0.0
        %1157 = vmatpush2.xpose.msra.mxu0 0.0
        %1158 = vmatprep.subr.mxu0 0.0
        %1159 = vmatpush2.xpose.msra.mxu0 0.0
        %1160 = vmatprep.subr.mxu0 0.0
        %1161 = vmatpush2.xpose.msra.mxu0 0.0
        %1162 = vmatprep.subr.mxu0 0.0
        %1163 = vmatpush2.xpose.msra.mxu0 0.0
        %1164 = vmatprep.subr.mxu0 0.0
        %1165 = vmatpush2.xpose.msra.mxu0 0.0
        %1166 = vmatprep.subr.mxu0 0.0
        %1167 = vmatpush2.xpose.msra.mxu0 0.0
        %1168 = vmatprep.subr.mxu0 0.0
        %1169 = vmatpush2.xpose.msra.mxu0 0.0
        %1170 = vmatprep.subr.mxu0 0.0
        %1171 = vmatpush2.xpose.msra.mxu0 0.0
        %1172 = vmatprep.subr.mxu0 0.0
        %1173 = vmatpush2.xpose.msra.mxu0 0.0
        %1174 = vmatprep.subr.mxu0 0.0
        %1175 = vmatpush2.xpose.msra.mxu0 0.0
        %1176 = vmatprep.subr.mxu0 0.0
        %1177 = vmatpush2.xpose.msra.mxu0 0.0
        %1178 = vmatprep.mubr.f32.mxu0 0.0
        %1179 = vmatmul.mubr.f32.gmra.mxu0 %v1110
        %v1180 = vpop.f32.mrf.mxu0
        %v1181 = vadd.f32 0.0, %v1180
        %v1182 = vpop.f32.mrf.mxu0
        %1183 = vdwg.mxu0
        %v1184 = vsel %vm777, %v1181, -inf
        %1185 = vmax.xlane.f32.xlu0 %v1184
        %v1186 = vpop.xlane.xlu0 %1185
        %v1187 = vsub.f32 %v1181, %v1186
        %v1188 = vmul.f32 %v1187, 1.442695
        %v1189 = vpow.pop %v1188
        %v1190 = vsel %vm777, %v1189, 0.0
        %1191 = vadd.xlane.f32.xlu0 %v1190
        %v1192 = vpop.xlane.xlu0 %1191
        %v1193 = vrcp.pop %v1192
        %v1194 = vmul.f32 %v1189, %v1193
        %1195 = vrot.lane.b32.xlu0 %v774, 80
        %v1196 = vpop.permute.xlu0 %1195
        %v1199 = vsel %vm777, %v1194, 0
        %1201 = vmatprep.subr.mxu0 0.0
        %1202 = vmatpush1.msra.mxu0 0.0
        %1203 = vmatprep.subr.mxu0 0.0
        %1204 = vmatpush1.msra.mxu0 0.0
        %1205 = vmatprep.subr.mxu0 0.0
        %1206 = vmatpush1.msra.mxu0 0.0
        %1207 = vmatprep.subr.mxu0 0.0
        %1208 = vmatpush1.msra.mxu0 0.0
        %1209 = vmatprep.subr.mxu0 0.0
        %1210 = vmatpush1.msra.mxu0 0.0
        %1211 = vmatprep.subr.mxu0 0.0
        %1212 = vmatpush1.msra.mxu0 0.0
        %1213 = vmatprep.subr.mxu0 0.0
        %1214 = vmatpush1.msra.mxu0 0.0
        %1215 = vmatprep.subr.mxu0 0.0
        %1216 = vmatpush1.msra.mxu0 0.0
        %1217 = vmatprep.subr.mxu0 0.0
        %1218 = vmatpush1.msra.mxu0 0.0
        %1219 = vmatprep.subr.mxu0 0.0
        %1220 = vmatpush1.msra.mxu0 0.0
        %1221 = vmatprep.subr.mxu0 0.0
        %1222 = vmatpush1.msra.mxu0 0.0
        %1223 = vmatprep.subr.mxu0 0.0
        %1224 = vmatpush1.msra.mxu0 0.0
        %1225 = vmatprep.subr.mxu0 0.0
        %1226 = vmatpush1.msra.mxu0 0.0
        %1227 = vmatprep.subr.mxu0 0.0
        %1228 = vmatpush1.msra.mxu0 0.0
        %1229 = vmatprep.subr.mxu0 0.0
        %1230 = vmatpush1.msra.mxu0 0.0
        %1231 = vmatprep.subr.mxu0 0.0
        %1232 = vmatpush1.msra.mxu0 %v1196
        %1233 = vmatprep.subr.mxu0 0.0
        %1234 = vmatpush2.msra.mxu0 0.0
        %1235 = vmatprep.subr.mxu0 0.0
        %1236 = vmatpush2.msra.mxu0 0.0
        %1237 = vmatprep.subr.mxu0 0.0
        %1238 = vmatpush2.msra.mxu0 0.0
        %1239 = vmatprep.subr.mxu0 0.0
        %1240 = vmatpush2.msra.mxu0 0.0
        %1241 = vmatprep.subr.mxu0 0.0
        %1242 = vmatpush2.msra.mxu0 0.0
        %1243 = vmatprep.subr.mxu0 0.0
        %1244 = vmatpush2.msra.mxu0 0.0
        %1245 = vmatprep.subr.mxu0 0.0
        %1246 = vmatpush2.msra.mxu0 0.0
        %1247 = vmatprep.subr.mxu0 0.0
        %1248 = vmatpush2.msra.mxu0 0.0
        %1249 = vmatprep.subr.mxu0 0.0
        %1250 = vmatpush2.msra.mxu0 0.0
        %1251 = vmatprep.subr.mxu0 0.0
        %1252 = vmatpush2.msra.mxu0 0.0
        %1253 = vmatprep.subr.mxu0 0.0
        %1254 = vmatpush2.msra.mxu0 0.0
        %1255 = vmatprep.subr.mxu0 0.0
        %1256 = vmatpush2.msra.mxu0 0.0
        %1257 = vmatprep.subr.mxu0 0.0
        %1258 = vmatpush2.msra.mxu0 0.0
        %1259 = vmatprep.subr.mxu0 0.0
        %1260 = vmatpush2.msra.mxu0 0.0
        %1261 = vmatprep.subr.mxu0 0.0
        %1262 = vmatpush2.msra.mxu0 0.0
        %1263 = vmatprep.subr.mxu0 0.0
        %1264 = vmatpush2.msra.mxu0 0.0
        %1265 = vmatprep.mubr.f32.mxu0 0.0
        %1266 = vmatmul.mubr.f32.gmra.mxu0 %v1199
        %v1267 = vpop.f32.mrf.mxu0
        %v1268 = vadd.f32 0.0, %v1267
        %v1269 = vpop.f32.mrf.mxu0
        %1270 = vdwg.mxu0
        %1271 = vrot.lane.b32.xlu0 %v692, 104
        %v1272 = vpop.permute.xlu0 %1271
        %1273 = vrot.lane.b32.xlu0 %v774, 104
        %v1274 = vpop.permute.xlu0 %1273
        %v1275 = vsel %vm777, %v1272, 0
        %v1277 = vsel %vm777, %v1274, 0
        %1279 = vmatprep.subr.mxu0 0.0
        %1280 = vmatpush1.xpose.msra.mxu0 0.0
        %1281 = vmatprep.subr.mxu0 0.0
        %1282 = vmatpush1.xpose.msra.mxu0 0.0
        %1283 = vmatprep.subr.mxu0 0.0
        %1284 = vmatpush1.xpose.msra.mxu0 0.0
        %1285 = vmatprep.subr.mxu0 0.0
        %1286 = vmatpush1.xpose.msra.mxu0 0.0
        %1287 = vmatprep.subr.mxu0 0.0
        %1288 = vmatpush1.xpose.msra.mxu0 0.0
        %1289 = vmatprep.subr.mxu0 0.0
        %1290 = vmatpush1.xpose.msra.mxu0 0.0
        %1291 = vmatprep.subr.mxu0 0.0
        %1292 = vmatpush1.xpose.msra.mxu0 0.0
        %1293 = vmatprep.subr.mxu0 0.0
        %1294 = vmatpush1.xpose.msra.mxu0 0.0
        %1295 = vmatprep.subr.mxu0 0.0
        %1296 = vmatpush1.xpose.msra.mxu0 0.0
        %1297 = vmatprep.subr.mxu0 0.0
        %1298 = vmatpush1.xpose.msra.mxu0 0.0
        %1299 = vmatprep.subr.mxu0 0.0
        %1300 = vmatpush1.xpose.msra.mxu0 0.0
        %1301 = vmatprep.subr.mxu0 0.0
        %1302 = vmatpush1.xpose.msra.mxu0 0.0
        %1303 = vmatprep.subr.mxu0 0.0
        %1304 = vmatpush1.xpose.msra.mxu0 0.0
        %1305 = vmatprep.subr.mxu0 0.0
        %1306 = vmatpush1.xpose.msra.mxu0 0.0
        %1307 = vmatprep.subr.mxu0 0.0
        %1308 = vmatpush1.xpose.msra.mxu0 0.0
        %1309 = vmatprep.subr.mxu0 0.0
        %1310 = vmatpush1.xpose.msra.mxu0 %v1277
        %1311 = vmatprep.subr.mxu0 0.0
        %1312 = vmatpush2.xpose.msra.mxu0 0.0
        %1313 = vmatprep.subr.mxu0 0.0
        %1314 = vmatpush2.xpose.msra.mxu0 0.0
        %1315 = vmatprep.subr.mxu0 0.0
        %1316 = vmatpush2.xpose.msra.mxu0 0.0
        %1317 = vmatprep.subr.mxu0 0.0
        %1318 = vmatpush2.xpose.msra.mxu0 0.0
        %1319 = vmatprep.subr.mxu0 0.0
        %1320 = vmatpush2.xpose.msra.mxu0 0.0
        %1321 = vmatprep.subr.mxu0 0.0
        %1322 = vmatpush2.xpose.msra.mxu0 0.0
        %1323 = vmatprep.subr.mxu0 0.0
        %1324 = vmatpush2.xpose.msra.mxu0 0.0
        %1325 = vmatprep.subr.mxu0 0.0
        %1326 = vmatpush2.xpose.msra.mxu0 0.0
        %1327 = vmatprep.subr.mxu0 0.0
        %1328 = vmatpush2.xpose.msra.mxu0 0.0
        %1329 = vmatprep.subr.mxu0 0.0
        %1330 = vmatpush2.xpose.msra.mxu0 0.0
        %1331 = vmatprep.subr.mxu0 0.0
        %1332 = vmatpush2.xpose.msra.mxu0 0.0
        %1333 = vmatprep.subr.mxu0 0.0
        %1334 = vmatpush2.xpose.msra.mxu0 0.0
        %1335 = vmatprep.subr.mxu0 0.0
        %1336 = vmatpush2.xpose.msra.mxu0 0.0
        %1337 = vmatprep.subr.mxu0 0.0
        %1338 = vmatpush2.xpose.msra.mxu0 0.0
        %1339 = vmatprep.subr.mxu0 0.0
        %1340 = vmatpush2.xpose.msra.mxu0 0.0
        %1341 = vmatprep.subr.mxu0 0.0
        %1342 = vmatpush2.xpose.msra.mxu0 0.0
        %1343 = vmatprep.mubr.f32.mxu0 0.0
        %1344 = vmatmul.mubr.f32.gmra.mxu0 %v1275
        %v1345 = vpop.f32.mrf.mxu0
        %v1346 = vadd.f32 0.0, %v1345
        %v1347 = vpop.f32.mrf.mxu0
        %1348 = vdwg.mxu0
        %v1349 = vsel %vm777, %v1346, -inf
        %1350 = vmax.xlane.f32.xlu0 %v1349
        %v1351 = vpop.xlane.xlu0 %1350
        %v1352 = vsub.f32 %v1346, %v1351
        %v1353 = vmul.f32 %v1352, 1.442695
        %v1354 = vpow.pop %v1353
        %v1355 = vsel %vm777, %v1354, 0.0
        %1356 = vadd.xlane.f32.xlu0 %v1355
        %v1357 = vpop.xlane.xlu0 %1356
        %v1358 = vrcp.pop %v1357
        %v1359 = vmul.f32 %v1354, %v1358
        %1360 = vrot.lane.b32.xlu0 %v774, 72
        %v1361 = vpop.permute.xlu0 %1360
        %v1364 = vsel %vm777, %v1359, 0
        %1366 = vmatprep.subr.mxu0 0.0
        %1367 = vmatpush1.msra.mxu0 0.0
        %1368 = vmatprep.subr.mxu0 0.0
        %1369 = vmatpush1.msra.mxu0 0.0
        %1370 = vmatprep.subr.mxu0 0.0
        %1371 = vmatpush1.msra.mxu0 0.0
        %1372 = vmatprep.subr.mxu0 0.0
        %1373 = vmatpush1.msra.mxu0 0.0
        %1374 = vmatprep.subr.mxu0 0.0
        %1375 = vmatpush1.msra.mxu0 0.0
        %1376 = vmatprep.subr.mxu0 0.0
        %1377 = vmatpush1.msra.mxu0 0.0
        %1378 = vmatprep.subr.mxu0 0.0
        %1379 = vmatpush1.msra.mxu0 0.0
        %1380 = vmatprep.subr.mxu0 0.0
        %1381 = vmatpush1.msra.mxu0 0.0
        %1382 = vmatprep.subr.mxu0 0.0
        %1383 = vmatpush1.msra.mxu0 0.0
        %1384 = vmatprep.subr.mxu0 0.0
        %1385 = vmatpush1.msra.mxu0 0.0
        %1386 = vmatprep.subr.mxu0 0.0
        %1387 = vmatpush1.msra.mxu0 0.0
        %1388 = vmatprep.subr.mxu0 0.0
        %1389 = vmatpush1.msra.mxu0 0.0
        %1390 = vmatprep.subr.mxu0 0.0
        %1391 = vmatpush1.msra.mxu0 0.0
        %1392 = vmatprep.subr.mxu0 0.0
        %1393 = vmatpush1.msra.mxu0 0.0
        %1394 = vmatprep.subr.mxu0 0.0
        %1395 = vmatpush1.msra.mxu0 0.0
        %1396 = vmatprep.subr.mxu0 0.0
        %1397 = vmatpush1.msra.mxu0 %v1361
        %1398 = vmatprep.subr.mxu0 0.0
        %1399 = vmatpush2.msra.mxu0 0.0
        %1400 = vmatprep.subr.mxu0 0.0
        %1401 = vmatpush2.msra.mxu0 0.0
        %1402 = vmatprep.subr.mxu0 0.0
        %1403 = vmatpush2.msra.mxu0 0.0
        %1404 = vmatprep.subr.mxu0 0.0
        %1405 = vmatpush2.msra.mxu0 0.0
        %1406 = vmatprep.subr.mxu0 0.0
        %1407 = vmatpush2.msra.mxu0 0.0
        %1408 = vmatprep.subr.mxu0 0.0
        %1409 = vmatpush2.msra.mxu0 0.0
        %1410 = vmatprep.subr.mxu0 0.0
        %1411 = vmatpush2.msra.mxu0 0.0
        %1412 = vmatprep.subr.mxu0 0.0
        %1413 = vmatpush2.msra.mxu0 0.0
        %1414 = vmatprep.subr.mxu0 0.0
        %1415 = vmatpush2.msra.mxu0 0.0
        %1416 = vmatprep.subr.mxu0 0.0
        %1417 = vmatpush2.msra.mxu0 0.0
        %1418 = vmatprep.subr.mxu0 0.0
        %1419 = vmatpush2.msra.mxu0 0.0
        %1420 = vmatprep.subr.mxu0 0.0
        %1421 = vmatpush2.msra.mxu0 0.0
        %1422 = vmatprep.subr.mxu0 0.0
        %1423 = vmatpush2.msra.mxu0 0.0
        %1424 = vmatprep.subr.mxu0 0.0
        %1425 = vmatpush2.msra.mxu0 0.0
        %1426 = vmatprep.subr.mxu0 0.0
        %1427 = vmatpush2.msra.mxu0 0.0
        %1428 = vmatprep.subr.mxu0 0.0
        %1429 = vmatpush2.msra.mxu0 0.0
        %1430 = vmatprep.mubr.f32.mxu0 0.0
        %1431 = vmatmul.mubr.f32.gmra.mxu0 %v1364
        %v1432 = vpop.f32.mrf.mxu0
        %v1433 = vadd.f32 0.0, %v1432
        %v1434 = vpop.f32.mrf.mxu0
        %1435 = vdwg.mxu0
        %1437 = vrot.lane.b32.xlu0 %v1103, 8
        %v1438 = vpop.permute.xlu0 %1437
        %1441 = vrot.lane.b32.xlu0 %v1268, 16
        %v1442 = vpop.permute.xlu0 %1441
        %1445 = vrot.lane.b32.xlu0 %v1433, 24
        %v1446 = vpop.permute.xlu0 %1445
        %v1448 = vsel %vm777, %v938, %v1438
        %vm1449 = vcmask 130048
        %v1450 = vsel %vm1449, %v1448, %v1442
        %vm1451 = vcmask 195584
        %v1452 = vsel %vm1451, %v1450, %v1446
        %v1453 = vld [vmem:[%s6] sm:$0xff]
        %v1454 = vld [vmem:[%s6 + $0x8] sm:$0xff]
        %v1455 = vld [vmem:[%s6 + $0x10] sm:$0xff]
        %v1456 = vld [vmem:[%s6 + $0x18] sm:$0xff]
        %v1457 = vld [vmem:[%s7] sm:$0x1]
        %v1459 = vlaneseq
        %v1460 = vshrl.u32 %v1459, 7
        %v1461 = vsub.s32 0, %v1460
        %v1462 = vrot.slane %v1457, %v1461
        %v1465 = vsel %vm618, %v1452, 0
        %1467 = vmatprep.subr.mxu0 0.0
        %1468 = vmatpush1.msra.mxu0 0.0
        %1469 = vmatprep.subr.mxu0 0.0
        %1470 = vmatpush1.msra.mxu0 0.0
        %1471 = vmatprep.subr.mxu0 0.0
        %1472 = vmatpush1.msra.mxu0 0.0
        %1473 = vmatprep.subr.mxu0 0.0
        %1474 = vmatpush1.msra.mxu0 0.0
        %1475 = vmatprep.subr.mxu0 0.0
        %1476 = vmatpush1.msra.mxu0 0.0
        %1477 = vmatprep.subr.mxu0 0.0
        %1478 = vmatpush1.msra.mxu0 0.0
        %1479 = vmatprep.subr.mxu0 0.0
        %1480 = vmatpush1.msra.mxu0 0.0
        %1481 = vmatprep.subr.mxu0 0.0
        %1482 = vmatpush1.msra.mxu0 0.0
        %1483 = vmatprep.subr.mxu0 0.0
        %1484 = vmatpush1.msra.mxu0 0.0
        %1485 = vmatprep.subr.mxu0 0.0
        %1486 = vmatpush1.msra.mxu0 0.0
        %1487 = vmatprep.subr.mxu0 0.0
        %1488 = vmatpush1.msra.mxu0 0.0
        %1489 = vmatprep.subr.mxu0 0.0
        %1490 = vmatpush1.msra.mxu0 0.0
        %1491 = vmatprep.subr.mxu0 0.0
        %1492 = vmatpush1.msra.mxu0 %v1456
        %1493 = vmatprep.subr.mxu0 0.0
        %1494 = vmatpush1.msra.mxu0 %v1455
        %1495 = vmatprep.subr.mxu0 0.0
        %1496 = vmatpush1.msra.mxu0 %v1454
        %1497 = vmatprep.subr.mxu0 0.0
        %1498 = vmatpush1.msra.mxu0 %v1453
        %1499 = vmatprep.subr.mxu0 0.0
        %1500 = vmatpush2.msra.mxu0 0.0
        %1501 = vmatprep.subr.mxu0 0.0
        %1502 = vmatpush2.msra.mxu0 0.0
        %1503 = vmatprep.subr.mxu0 0.0
        %1504 = vmatpush2.msra.mxu0 0.0
        %1505 = vmatprep.subr.mxu0 0.0
        %1506 = vmatpush2.msra.mxu0 0.0
        %1507 = vmatprep.subr.mxu0 0.0
        %1508 = vmatpush2.msra.mxu0 0.0
        %1509 = vmatprep.subr.mxu0 0.0
        %1510 = vmatpush2.msra.mxu0 0.0
        %1511 = vmatprep.subr.mxu0 0.0
        %1512 = vmatpush2.msra.mxu0 0.0
        %1513 = vmatprep.subr.mxu0 0.0
        %1514 = vmatpush2.msra.mxu0 0.0
        %1515 = vmatprep.subr.mxu0 0.0
        %1516 = vmatpush2.msra.mxu0 0.0
        %1517 = vmatprep.subr.mxu0 0.0
        %1518 = vmatpush2.msra.mxu0 0.0
        %1519 = vmatprep.subr.mxu0 0.0
        %1520 = vmatpush2.msra.mxu0 0.0
        %1521 = vmatprep.subr.mxu0 0.0
        %1522 = vmatpush2.msra.mxu0 0.0
        %1523 = vmatprep.subr.mxu0 0.0
        %1524 = vmatpush2.msra.mxu0 0.0
        %1525 = vmatprep.subr.mxu0 0.0
        %1526 = vmatpush2.msra.mxu0 0.0
        %1527 = vmatprep.subr.mxu0 0.0
        %1528 = vmatpush2.msra.mxu0 0.0
        %1529 = vmatprep.subr.mxu0 0.0
        %1530 = vmatpush2.msra.mxu0 0.0
        %1531 = vmatprep.mubr.f32.mxu0 0.0
        %1532 = vmatmul.mubr.f32.gmra.mxu0 %v1465
        %v1533 = vpop.f32.mrf.mxu0
        %v1534 = vadd.f32 %v1462, %v1533
        %v1535 = vpop.f32.mrf.mxu0
        %1536 = vdwg.mxu0
        %v1537 = vadd.f32 %v605, %v1534
        %v1538 = vld [vmem:[%s12] sm:$0x1]
        %v1539 = vld [vmem:[%s13] sm:$0x1]
        %v1540 = vsel %vm618, %v1537, 0.0
        %1541 = vadd.xlane.f32.xlu0 %v1540
        %v1542 = vpop.xlane.xlu0 %1541
        %v1543 = vrcp.pop 32.0
        %v1544 = vmul.f32 %v1542, %v1543
        %v1545 = vsub.f32 %v1537, %v1544
        %v1546 = vmul.f32 %v1545, %v1545
        %v1547 = vsel %vm618, %v1546, 0.0
        %1548 = vadd.xlane.f32.xlu0 %v1547
        %v1549 = vpop.xlane.xlu0 %1548
        %v1550 = vmul.f32 %v1549, %v1543
        %v1551 = vadd.f32 %v1550, 1e-05
        %v1552 = vrsqrt.pop %v1551
        %v1553 = vmul.f32 %v1545, %v1552
        %v1555 = vlaneseq
        %v1556 = vshrl.u32 %v1555, 7
        %v1557 = vsub.s32 0, %v1556
        %v1558 = vrot.slane %v1538, %v1557
        %v1560 = vmul.f32 %v1553, %v1558
        %v1562 = vlaneseq
        %v1563 = vshrl.u32 %v1562, 7
        %v1564 = vsub.s32 0, %v1563
        %v1565 = vrot.slane %v1539, %v1564
        %v1567 = vadd.f32 %v1560, %v1565
        %v1568 = vld [vmem:[#allocation7] sm:$0xff]
        %v1569 = vld [vmem:[#allocation7 + $0x8] sm:$0xff]
        %v1570 = vld [vmem:[#allocation7 + $0x10] sm:$0xff]
        %v1571 = vld [vmem:[#allocation7 + $0x18] sm:$0xff]
        %v1572 = vld [vmem:[%s9] sm:$0x1]
        %v1574 = vlaneseq
        %v1575 = vshrl.u32 %v1574, 7
        %v1576 = vsub.s32 0, %v1575
        %v1577 = vrot.slane %v1572, %v1576
        %v1580 = vsel %vm618, %v1567, 0
        %1582 = vmatprep.subr.mxu0 0.0
        %1583 = vmatpush1.msra.mxu0 0.0
        %1584 = vmatprep.subr.mxu0 0.0
        %1585 = vmatpush1.msra.mxu0 0.0
        %1586 = vmatprep.subr.mxu0 0.0
        %1587 = vmatpush1.msra.mxu0 0.0
        %1588 = vmatprep.subr.mxu0 0.0
        %1589 = vmatpush1.msra.mxu0 0.0
        %1590 = vmatprep.subr.mxu0 0.0
        %1591 = vmatpush1.msra.mxu0 0.0
        %1592 = vmatprep.subr.mxu0 0.0
        %1593 = vmatpush1.msra.mxu0 0.0
        %1594 = vmatprep.subr.mxu0 0.0
        %1595 = vmatpush1.msra.mxu0 0.0
        %1596 = vmatprep.subr.mxu0 0.0
        %1597 = vmatpush1.msra.mxu0 0.0
        %1598 = vmatprep.subr.mxu0 0.0
        %1599 = vmatpush1.msra.mxu0 0.0
        %1600 = vmatprep.subr.mxu0 0.0
        %1601 = vmatpush1.msra.mxu0 0.0
        %1602 = vmatprep.subr.mxu0 0.0
        %1603 = vmatpush1.msra.mxu0 0.0
        %1604 = vmatprep.subr.mxu0 0.0
        %1605 = vmatpush1.msra.mxu0 0.0
        %1606 = vmatprep.subr.mxu0 0.0
        %1607 = vmatpush1.msra.mxu0 %v1571
        %1608 = vmatprep.subr.mxu0 0.0
        %1609 = vmatpush1.msra.mxu0 %v1570
        %1610 = vmatprep.subr.mxu0 0.0
        %1611 = vmatpush1.msra.mxu0 %v1569
        %1612 = vmatprep.subr.mxu0 0.0
        %1613 = vmatpush1.msra.mxu0 %v1568
        %1614 = vmatprep.subr.mxu0 0.0
        %1615 = vmatpush2.msra.mxu0 0.0
        %1616 = vmatprep.subr.mxu0 0.0
        %1617 = vmatpush2.msra.mxu0 0.0
        %1618 = vmatprep.subr.mxu0 0.0
        %1619 = vmatpush2.msra.mxu0 0.0
        %1620 = vmatprep.subr.mxu0 0.0
        %1621 = vmatpush2.msra.mxu0 0.0
        %1622 = vmatprep.subr.mxu0 0.0
        %1623 = vmatpush2.msra.mxu0 0.0
        %1624 = vmatprep.subr.mxu0 0.0
        %1625 = vmatpush2.msra.mxu0 0.0
        %1626 = vmatprep.subr.mxu0 0.0
        %1627 = vmatpush2.msra.mxu0 0.0
        %1628 = vmatprep.subr.mxu0 0.0
        %1629 = vmatpush2.msra.mxu0 0.0
        %1630 = vmatprep.subr.mxu0 0.0
        %1631 = vmatpush2.msra.mxu0 0.0
        %1632 = vmatprep.subr.mxu0 0.0
        %1633 = vmatpush2.msra.mxu0 0.0
        %1634 = vmatprep.subr.mxu0 0.0
        %1635 = vmatpush2.msra.mxu0 0.0
        %1636 = vmatprep.subr.mxu0 0.0
        %1637 = vmatpush2.msra.mxu0 0.0
        %1638 = vmatprep.subr.mxu0 0.0
        %1639 = vmatpush2.msra.mxu0 0.0
        %1640 = vmatprep.subr.mxu0 0.0
        %1641 = vmatpush2.msra.mxu0 0.0
        %1642 = vmatprep.subr.mxu0 0.0
        %1643 = vmatpush2.msra.mxu0 0.0
        %1644 = vmatprep.subr.mxu0 0.0
        %1645 = vmatpush2.msra.mxu0 0.0
        %1646 = vmatprep.mubr.f32.mxu0 0.0
        %1647 = vmatmul.mubr.f32.gmra.mxu0 %v1580
        %v1648 = vpop.f32.mrf.mxu0
        %v1649 = vadd.f32 %v1577, %v1648
        %v1650 = vpop.f32.mrf.mxu0
        %1651 = vdwg.mxu0
        %v1652 = vmax.f32 %v1649, 0.0
        %v1653 = vld [vmem:[%s10] sm:$0xff]
        %v1654 = vld [vmem:[%s10 + $0x8] sm:$0xff]
        %v1655 = vld [vmem:[%s10 + $0x10] sm:$0xff]
        %v1656 = vld [vmem:[%s10 + $0x18] sm:$0xff]
        %v1657 = vld [vmem:[%s10 + $0x20] sm:$0xff]
        %v1658 = vld [vmem:[%s10 + $0x28] sm:$0xff]
        %v1659 = vld [vmem:[%s10 + $0x30] sm:$0xff]
        %v1660 = vld [vmem:[%s10 + $0x38] sm:$0xff]
        %v1661 = vld [vmem:[%s11] sm:$0x1]
        %v1663 = vlaneseq
        %v1664 = vshrl.u32 %v1663, 7
        %v1665 = vsub.s32 0, %v1664
        %v1666 = vrot.slane %v1661, %v1665
        %vm1668 = vcmask 523264
        %v1670 = vsel %vm1668, %v1652, 0
        %1672 = vmatprep.subr.mxu0 0.0
        %1673 = vmatpush1.msra.mxu0 0.0
        %1674 = vmatprep.subr.mxu0 0.0
        %1675 = vmatpush1.msra.mxu0 0.0
        %1676 = vmatprep.subr.mxu0 0.0
        %1677 = vmatpush1.msra.mxu0 0.0
        %1678 = vmatprep.subr.mxu0 0.0
        %1679 = vmatpush1.msra.mxu0 0.0
        %1680 = vmatprep.subr.mxu0 0.0
        %1681 = vmatpush1.msra.mxu0 0.0
        %1682 = vmatprep.subr.mxu0 0.0
        %1683 = vmatpush1.msra.mxu0 0.0
        %1684 = vmatprep.subr.mxu0 0.0
        %1685 = vmatpush1.msra.mxu0 0.0
        %1686 = vmatprep.subr.mxu0 0.0
        %1687 = vmatpush1.msra.mxu0 0.0
        %1688 = vmatprep.subr.mxu0 0.0
        %1689 = vmatpush1.msra.mxu0 %v1660
        %1690 = vmatprep.subr.mxu0 0.0
        %1691 = vmatpush1.msra.mxu0 %v1659
        %1692 = vmatprep.subr.mxu0 0.0
        %1693 = vmatpush1.msra.mxu0 %v1658
        %1694 = vmatprep.subr.mxu0 0.0
        %1695 = vmatpush1.msra.mxu0 %v1657
        %1696 = vmatprep.subr.mxu0 0.0
        %1697 = vmatpush1.msra.mxu0 %v1656
        %1698 = vmatprep.subr.mxu0 0.0
        %1699 = vmatpush1.msra.mxu0 %v1655
        %1700 = vmatprep.subr.mxu0 0.0
        %1701 = vmatpush1.msra.mxu0 %v1654
        %1702 = vmatprep.subr.mxu0 0.0
        %1703 = vmatpush1.msra.mxu0 %v1653
        %1704 = vmatprep.subr.mxu0 0.0
        %1705 = vmatpush2.msra.mxu0 0.0
        %1706 = vmatprep.subr.mxu0 0.0
        %1707 = vmatpush2.msra.mxu0 0.0
        %1708 = vmatprep.subr.mxu0 0.0
        %1709 = vmatpush2.msra.mxu0 0.0
        %1710 = vmatprep.subr.mxu0 0.0
        %1711 = vmatpush2.msra.mxu0 0.0
        %1712 = vmatprep.subr.mxu0 0.0
        %1713 = vmatpush2.msra.mxu0 0.0
        %1714 = vmatprep.subr.mxu0 0.0
        %1715 = vmatpush2.msra.mxu0 0.0
        %1716 = vmatprep.subr.mxu0 0.0
        %1717 = vmatpush2.msra.mxu0 0.0
        %1718 = vmatprep.subr.mxu0 0.0
        %1719 = vmatpush2.msra.mxu0 0.0
        %1720 = vmatprep.subr.mxu0 0.0
        %1721 = vmatpush2.msra.mxu0 0.0
        %1722 = vmatprep.subr.mxu0 0.0
        %1723 = vmatpush2.msra.mxu0 0.0
        %1724 = vmatprep.subr.mxu0 0.0
        %1725 = vmatpush2.msra.mxu0 0.0
        %1726 = vmatprep.subr.mxu0 0.0
        %1727 = vmatpush2.msra.mxu0 0.0
        %1728 = vmatprep.subr.mxu0 0.0
        %1729 = vmatpush2.msra.mxu0 0.0
        %1730 = vmatprep.subr.mxu0 0.0
        %1731 = vmatpush2.msra.mxu0 0.0
        %1732 = vmatprep.subr.mxu0 0.0
        %1733 = vmatpush2.msra.mxu0 0.0
        %1734 = vmatprep.subr.mxu0 0.0
        %1735 = vmatpush2.msra.mxu0 0.0
        %1736 = vmatprep.mubr.f32.mxu0 0.0
        %1737 = vmatmul.mubr.f32.gmra.mxu0 %v1670
        %v1738 = vpop.f32.mrf.mxu0
        %v1739 = vadd.f32 %v1666, %v1738
        %v1740 = vpop.f32.mrf.mxu0
        %1741 = vdwg.mxu0
        %v1742 = vadd.f32 %v1567, %v1739
        %v1743 = vld [vmem:[%s14] sm:$0x1]
        %v1744 = vld [vmem:[%s15] sm:$0x1]
        %v1745 = vsel %vm618, %v1742, 0.0
        %1746 = vadd.xlane.f32.xlu0 %v1745
        %v1747 = vpop.xlane.xlu0 %1746
        %v1748 = vmul.f32 %v1747, %v1543
        %v1749 = vsub.f32 %v1742, %v1748
        %v1750 = vmul.f32 %v1749, %v1749
        %v1751 = vsel %vm618, %v1750, 0.0
        %1752 = vadd.xlane.f32.xlu0 %v1751
        %v1753 = vpop.xlane.xlu0 %1752
        %v1754 = vmul.f32 %v1753, %v1543
        %v1755 = vadd.f32 %v1754, 1e-05
        %v1756 = vrsqrt.pop %v1755
        %v1757 = vmul.f32 %v1749, %v1756
        %v1759 = vlaneseq
        %v1760 = vshrl.u32 %v1759, 7
        %v1761 = vsub.s32 0, %v1760
        %v1762 = vrot.slane %v1743, %v1761
        %v1764 = vmul.f32 %v1757, %v1762
        %v1766 = vlaneseq
        %v1767 = vshrl.u32 %v1766, 7
        %v1768 = vsub.s32 0, %v1767
        %v1769 = vrot.slane %v1744, %v1768
        %v1771 = vadd.f32 %v1764, %v1769
        %1772 = vst.msk [vmem:[%s604] sm:$0xff] %vm618, %v1771
        %s1773 = sand.u32 %s406, 1
        %s1774 = scalar_lea.sflag [#allocation4], %s1773
        %s1775 = sand.u32 %s406, 1
        %s1776 = smul.addr %s1775, 8
        %s1777 = scalar_lea.vmem [#allocation8], %s1776
        // Predicated region
        $region97: #{tpu_custom_call.1} parent=83 // pred_check
          %p1778 = pneg %p416
        $region98: #{tpu_custom_call.1} parent=83 // pred_check_branch
          %1780 = sbr.rel (%p1778) target = $region100
        $region99: #{tpu_custom_call.1} parent=83 // pred_region
          %s1782 = ssub.s32 128, 128
          %1783 = vsyncadd %s1774, %s1782
          %s1784 = sadd.s32 %s41, %s40
          %s1785 = smul.addr %s1784, 128
          %s1786 = scalar_lea.hbm %s16, %s1785
          %s1788 = sshll.u32 %s1777, 4
          %s1789 = int_to_ptr.vmem [resolvable:$true] %s1788
          %1791 = dma.vmem_to_hbm [thread:$0]  %s1789, 128, %s1786, %s1774
        $region100: #{tpu_custom_call.1} parent=83 // pred_fallthru
          _
      $region84: #{tpu_custom_call.1} parent=5 // pred_fallthru
        _
      %p1792 = scmp.le.s32.totalorder 2, %s31
      // Predicated region
      $region101: #{tpu_custom_call.1} parent=5 // pred_check
        %p1793 = pneg %p1792
      $region102: #{tpu_custom_call.1} parent=5 // pred_check_branch
        %1795 = sbr.rel (%p1793) target = $region104
      $region103: #{tpu_custom_call.1} parent=5 // pred_region
        %s1796 = ssub.s32 %s31, 2
        // Predicated region
        $region105: #{tpu_custom_call.1} parent=103 // pred_check
          %p1797 = pneg %p422
        $region106: #{tpu_custom_call.1} parent=103 // pred_check_branch
          %1799 = sbr.rel (%p1797) target = $region108
        $region107: #{tpu_custom_call.1} parent=103 // pred_region
          %s1800 = sand.u32 %s407, 1
          %s1801 = scalar_lea.sflag [#allocation4], %s1800
          %s1802 = sand.u32 %s407, 1
          %s1803 = smul.addr %s1802, 8
          %s1804 = scalar_lea.vmem [#allocation8], %s1803
          %1805 = dma.done %s1801, 128
        $region108: #{tpu_custom_call.1} parent=103 // pred_fallthru
          _
      $region104: #{tpu_custom_call.1} parent=5 // pred_fallthru
        _
    $region6: #{tpu_custom_call.1} parent=1 // loop_footer
      %s35 = sadd.s32 1, %s31
    $region7: #{tpu_custom_call.1} parent=1 // loop_footer_branch
      %30 = sbr.rel target = $region3
    $region8: #{tpu_custom_call.1} parent=1 // loop_exit
      _
    %1806 = vsyncpa [#allocation3], 1
    %s1807 = scalar_lea.sflag [#allocation3], 1
    %1808 = vsyncpa %s1807, 1
    %1809 = vsyncpa [#allocation6], 1
    %s1810 = scalar_lea.sflag [#allocation6], 1
    %1811 = vsyncpa %s1810, 1
    %1812 = vsyncpa [#allocation4], 1
    %s1813 = scalar_lea.sflag [#allocation4], 1
    %1814 = vsyncpa %s1813, 1

</llo_original>
